<compile_context>
chip_gen: v5e
topology: v5e:2x2
jax: 0.10.0
libtpu: 0.0.40
codegen_flags: <defaults>
</compile_context>

<pallas_src>
import functools

import jax
import jax.numpy as jnp
from jax import lax
from jax.experimental import pallas as pl
from jax.experimental.pallas import tpu as pltpu

INPUT_SIZE = 28
HIDDEN_SIZE = 64
OUTPUT_SIZE = 10

LANE = 128
SUBLANE = 8


def _round_up(n, m):
    return ((n + m - 1) // m) * m


def _lstm_fc_kernel(x_ref, w_ih_ref, w_hh_ref, b_ref, w_fc_ref, b_fc_ref,
                    out_ref, gx_ref, *, T, Bp, Hp):
    """Full LSTM recurrence + final FC in one invocation (no grid; everything in VMEM).

    x_ref    : (T*Bp, I)    time-major input, rows grouped per timestep
    w_ih_ref : (I, 4*Hp)    input->gates weights (pre-transposed, gate blocks lane-padded)
    w_hh_ref : (Hp, 4*Hp)   hidden->gates weights (pre-transposed, lane-padded)
    b_ref    : (1, 4*Hp)    b_ih + b_hh combined (lane-padded per gate)
    w_fc_ref : (Hp, Op)     fc weights (pre-transposed, lane-padded)
    b_fc_ref : (1, Op)      fc bias (lane-padded)
    out_ref  : (Bp, Op)     logits (lane-dense)
    gx_ref   : (T*Bp, 4*Hp) VMEM scratch for the hoisted input projection
    """
    # Hoisted input projection: one batched matmul covering all T steps, bias folded in.
    gx_ref[...] = (
        jnp.dot(x_ref[...], w_ih_ref[...], preferred_element_type=jnp.float32)
        + b_ref[...]
    )

    w_hh = w_hh_ref[...]  # hoist: stays resident in vregs across the recurrence

    def step(t, carry):
        h, c = carry
        row = pl.multiple_of(t * Bp, Bp)
        gates = gx_ref[pl.ds(row, Bp), :] + jnp.dot(
            h, w_hh, preferred_element_type=jnp.float32)          # (Bp, 4*Hp)
        # Hp == 128 -> every gate slice is a whole 128-lane tile (no lane shuffles).
        i_g = jax.nn.sigmoid(gates[:, 0 * Hp:1 * Hp])
        f_g = jax.nn.sigmoid(gates[:, 1 * Hp:2 * Hp])
        g_g = jnp.tanh(gates[:, 2 * Hp:3 * Hp])
        o_g = jax.nn.sigmoid(gates[:, 3 * Hp:4 * Hp])
        c_new = f_g * c + i_g * g_g
        h_new = o_g * jnp.tanh(c_new)
        return (h_new, c_new)

    h0 = jnp.zeros((Bp, Hp), jnp.float32)
    c0 = jnp.zeros((Bp, Hp), jnp.float32)
    # T is small and static: fully unroll for cross-iteration scheduling visibility.
    h_last, _ = lax.fori_loop(0, T, step, (h0, c0), unroll=True)

    # Final FC on the last hidden state; lane-dense (Bp, Op) store.
    out_ref[...] = (
        jnp.dot(h_last, w_fc_ref[...], preferred_element_type=jnp.float32)
        + b_fc_ref[...]
    )


def _pad_gates(w, H, Hp):
    """w: (rows, 4H) -> (rows, 4Hp); zero-pad each of the 4 gate blocks from H to Hp."""
    blocks = [jnp.pad(w[:, g * H:(g + 1) * H], ((0, 0), (0, Hp - H))) for g in range(4)]
    return jnp.concatenate(blocks, axis=1)


def lstm_forward(x, w_ih, w_hh, b_ih, b_hh, w_fc, b_fc):
    """x: (B, T, I) batch_first. PyTorch parameter shapes:
       w_ih (4H, I), w_hh (4H, H), b_ih (4H,), b_hh (4H,), w_fc (O, H), b_fc (O,)."""
    B, T, I = x.shape
    H = w_hh.shape[1]
    O = w_fc.shape[0]

    Bp = max(_round_up(B, SUBLANE), SUBLANE)   # full sublane group
    Hp = max(_round_up(H, LANE), LANE)         # lane-aligned gate blocks
    Op = max(_round_up(O, LANE), LANE)         # lane-dense output

    f32 = jnp.float32
    # Time-major, batch zero-padded, flattened so each timestep is a (Bp, I) row group.
    x_tm = jnp.transpose(x.astype(f32), (1, 0, 2))                     # (T, B, I)
    x_tm = jnp.pad(x_tm, ((0, 0), (0, Bp - B), (0, 0)))                # (T, Bp, I)
    x_flat = x_tm.reshape(T * Bp, I)                                   # (T*Bp, I)

    w_ih_p = _pad_gates(jnp.transpose(w_ih).astype(f32), H, Hp)        # (I, 4Hp)
    w_hh_t = jnp.pad(jnp.transpose(w_hh).astype(f32), ((0, Hp - H), (0, 0)))
    w_hh_p = _pad_gates(w_hh_t, H, Hp)                                 # (Hp, 4Hp)
    b_p = _pad_gates((b_ih + b_hh).astype(f32).reshape(1, 4 * H), H, Hp)  # (1, 4Hp)
    w_fc_p = jnp.pad(jnp.transpose(w_fc).astype(f32),
                     ((0, Hp - H), (0, Op - O)))                       # (Hp, Op)
    b_fc_p = jnp.pad(b_fc.astype(f32).reshape(1, O), ((0, 0), (0, Op - O)))  # (1, Op)

    vmem = pl.BlockSpec(memory_space=pltpu.MemorySpace.VMEM)
    kernel = functools.partial(_lstm_fc_kernel, T=T, Bp=Bp, Hp=Hp)
    # TODO(synk): for large B, add a grid axis over batch tiles with
    # dimension_semantics=("parallel",) so v7x's second TensorCore is used.
    out_p = pl.pallas_call(
        kernel,
        out_shape=jax.ShapeDtypeStruct((Bp, Op), f32),
        in_specs=[vmem] * 6,
        out_specs=vmem,
        scratch_shapes=[pltpu.VMEM((T * Bp, 4 * Hp), f32)],
    )(x_flat, w_ih_p, w_hh_p, b_p, w_fc_p, b_fc_p)
    return out_p[:B, :O]


def lstm_reference(x, w_ih, w_hh, b_ih, b_hh, w_fc, b_fc):
    """Pure-JAX reference matching torch.nn.LSTM(batch_first=True) + Linear."""
    B, T, I = x.shape
    H = w_hh.shape[1]
    h = jnp.zeros((B, H), jnp.float32)
    c = jnp.zeros((B, H), jnp.float32)
    for t in range(T):
        gates = x[:, t, :] @ w_ih.T + b_ih + h @ w_hh.T + b_hh
        i_g = jax.nn.sigmoid(gates[:, 0 * H:1 * H])
        f_g = jax.nn.sigmoid(gates[:, 1 * H:2 * H])
        g_g = jnp.tanh(gates[:, 2 * H:3 * H])
        o_g = jax.nn.sigmoid(gates[:, 3 * H:4 * H])
        c = f_g * c + i_g * g_g
        h = o_g * jnp.tanh(c)
    return h @ w_fc.T + b_fc


if __name__ == "__main__":
    B, T = 2, 8
    I, H, O = INPUT_SIZE, HIDDEN_SIZE, OUTPUT_SIZE

    key = jax.random.PRNGKey(0)
    k_x, k1, k2, k3, k4, k5, k6 = jax.random.split(key, 7)

    # Deterministic init mimicking PyTorch's U(-1/sqrt(H), 1/sqrt(H)).
    s = 1.0 / jnp.sqrt(jnp.float32(H))
    x = jax.random.normal(k_x, (B, T, I), dtype=jnp.float32)
    w_ih = jax.random.uniform(k1, (4 * H, I), minval=-s, maxval=s, dtype=jnp.float32)
    w_hh = jax.random.uniform(k2, (4 * H, H), minval=-s, maxval=s, dtype=jnp.float32)
    b_ih = jax.random.uniform(k3, (4 * H,), minval=-s, maxval=s, dtype=jnp.float32)
    b_hh = jax.random.uniform(k4, (4 * H,), minval=-s, maxval=s, dtype=jnp.float32)
    w_fc = jax.random.uniform(k5, (O, H), minval=-s, maxval=s, dtype=jnp.float32)
    b_fc = jax.random.uniform(k6, (O,), minval=-s, maxval=s, dtype=jnp.float32)

    out = lstm_forward(x, w_ih, w_hh, b_ih, b_hh, w_fc, b_fc)
    out = jax.block_until_ready(out)

    ref = lstm_reference(x, w_ih, w_hh, b_ih, b_hh, w_fc, b_fc)
    assert out.shape == (B, O)
    assert jnp.allclose(out, ref, atol=1e-4, rtol=1e-4), (out, ref)

    print("KERNEL_OK")
</pallas_src>

<mosaic_0001>
module attributes {stable_mosaic.version = 11 : i64} {
  func.func @_lstm_fc_kernel(%arg0: memref<64x28xf32, #tpu.memory_space<vmem>>, %arg1: memref<28x512xf32, #tpu.memory_space<vmem>>, %arg2: memref<128x512xf32, #tpu.memory_space<vmem>>, %arg3: memref<1x512xf32, #tpu.memory_space<vmem>>, %arg4: memref<128x128xf32, #tpu.memory_space<vmem>>, %arg5: memref<1x128xf32, #tpu.memory_space<vmem>>, %arg6: memref<8x128xf32, #tpu.memory_space<vmem>>, %arg7: memref<64x512xf32, #tpu.memory_space<vmem>>) attributes {dimension_semantics = [], scalar_prefetch = 0 : i64, scratch_operands = 1 : i64, tpu.core_type = #tpu.core_type<tc>} {
    %c0 = arith.constant 0 : index
    %c0_0 = arith.constant 0 : index
    %0 = vector.load %arg0[%c0, %c0_0] : memref<64x28xf32, #tpu.memory_space<vmem>>, vector<64x28xf32>
    %c0_1 = arith.constant 0 : index
    %c0_2 = arith.constant 0 : index
    %1 = vector.load %arg1[%c0_1, %c0_2] : memref<28x512xf32, #tpu.memory_space<vmem>>, vector<28x512xf32>
    %cst = arith.constant dense<0.000000e+00> : vector<64x512xf32>
    %2 = tpu.matmul %0, %1, %cst {dimension_numbers = #tpu.dot_dimension_numbers<[1], [0], [0], [1], [0, 0, 1, 1], [], []>} : vector<64x28xf32>, vector<28x512xf32>, vector<64x512xf32> -> vector<64x512xf32>
    %c0_3 = arith.constant 0 : index
    %c0_4 = arith.constant 0 : index
    %3 = vector.load %arg3[%c0_3, %c0_4] : memref<1x512xf32, #tpu.memory_space<vmem>>, vector<1x512xf32>
    %4 = vector.broadcast %3 : vector<1x512xf32> to vector<64x512xf32>
    %5 = arith.addf %2, %4 : vector<64x512xf32>
    %c0_5 = arith.constant 0 : index
    %c0_6 = arith.constant 0 : index
    %6 = vector.load %arg7[%c0_5, %c0_6] : memref<64x512xf32, #tpu.memory_space<vmem>>, vector<64x512xf32>
    tpu.vector_store %arg7[%c0_5, %c0_6], %5 {strides = array<i32>} : memref<64x512xf32, #tpu.memory_space<vmem>>, vector<64x512xf32>,
    %c0_7 = arith.constant 0 : index
    %c0_8 = arith.constant 0 : index
    %7 = vector.load %arg2[%c0_7, %c0_8] : memref<128x512xf32, #tpu.memory_space<vmem>>, vector<128x512xf32>
    %cst_9 = arith.constant 0.000000e+00 : f32
    %8 = vector.broadcast %cst_9 : f32 to vector<8x128xf32>
    %cst_10 = arith.constant 0.000000e+00 : f32
    %9 = vector.broadcast %cst_10 : f32 to vector<8x128xf32>
    %c0_i32 = arith.constant 0 : i32
    %c8_i32 = arith.constant 8 : i32
    %10 = arith.muli %c0_i32, %c8_i32 : i32
    %11 = tpu.assume_multiple %10, 8 : i32
    %12 = arith.index_cast %11 : i32 to index
    %c0_11 = arith.constant 0 : index
    %13 = vector.load %arg7[%12, %c0_11] : memref<64x512xf32, #tpu.memory_space<vmem>>, vector<8x512xf32>
    %cst_12 = arith.constant dense<0.000000e+00> : vector<8x512xf32>
    %14 = tpu.matmul %8, %7, %cst_12 {dimension_numbers = #tpu.dot_dimension_numbers<[1], [0], [0], [1], [0, 0, 1, 1], [], []>} : vector<8x128xf32>, vector<128x512xf32>, vector<8x512xf32> -> vector<8x512xf32>
    %15 = arith.addf %13, %14 : vector<8x512xf32>
    %16 = vector.extract_strided_slice %15 {offsets = [0, 0], sizes = [8, 128], strides = [1, 1]} : vector<8x512xf32> to vector<8x128xf32>
    %17 = arith.negf %16 : vector<8x128xf32>
    %18 = math.exp %17 : vector<8x128xf32>
    %cst_13 = arith.constant 1.000000e+00 : f32
    %19 = vector.broadcast %cst_13 : f32 to vector<8x128xf32>
    %20 = arith.addf %19, %18 : vector<8x128xf32>
    %21 = arith.divf %19, %20 : vector<8x128xf32>
    %22 = vector.extract_strided_slice %15 {offsets = [0, 128], sizes = [8, 128], strides = [1, 1]} : vector<8x512xf32> to vector<8x128xf32>
    %23 = arith.negf %22 : vector<8x128xf32>
    %24 = math.exp %23 : vector<8x128xf32>
    %cst_14 = arith.constant 1.000000e+00 : f32
    %25 = vector.broadcast %cst_14 : f32 to vector<8x128xf32>
    %26 = arith.addf %25, %24 : vector<8x128xf32>
    %27 = arith.divf %25, %26 : vector<8x128xf32>
    %28 = vector.extract_strided_slice %15 {offsets = [0, 256], sizes = [8, 128], strides = [1, 1]} : vector<8x512xf32> to vector<8x128xf32>
    %29 = math.tanh %28 : vector<8x128xf32>
    %30 = vector.extract_strided_slice %15 {offsets = [0, 384], sizes = [8, 128], strides = [1, 1]} : vector<8x512xf32> to vector<8x128xf32>
    %31 = arith.negf %30 : vector<8x128xf32>
    %32 = math.exp %31 : vector<8x128xf32>
    %cst_15 = arith.constant 1.000000e+00 : f32
    %33 = vector.broadcast %cst_15 : f32 to vector<8x128xf32>
    %34 = arith.addf %33, %32 : vector<8x128xf32>
    %35 = arith.divf %33, %34 : vector<8x128xf32>
    %36 = arith.mulf %27, %9 : vector<8x128xf32>
    %37 = arith.mulf %21, %29 : vector<8x128xf32>
    %38 = arith.addf %36, %37 : vector<8x128xf32>
    %39 = math.tanh %38 : vector<8x128xf32>
    %40 = arith.mulf %35, %39 : vector<8x128xf32>
    %c1_i32 = arith.constant 1 : i32
    %c8_i32_16 = arith.constant 8 : i32
    %41 = arith.muli %c1_i32, %c8_i32_16 : i32
    %42 = tpu.assume_multiple %41, 8 : i32
    %43 = arith.index_cast %42 : i32 to index
    %c0_17 = arith.constant 0 : index
    %44 = vector.load %arg7[%43, %c0_17] : memref<64x512xf32, #tpu.memory_space<vmem>>, vector<8x512xf32>
    %cst_18 = arith.constant dense<0.000000e+00> : vector<8x512xf32>
    %45 = tpu.matmul %40, %7, %cst_18 {dimension_numbers = #tpu.dot_dimension_numbers<[1], [0], [0], [1], [0, 0, 1, 1], [], []>} : vector<8x128xf32>, vector<128x512xf32>, vector<8x512xf32> -> vector<8x512xf32>
    %46 = arith.addf %44, %45 : vector<8x512xf32>
    %47 = vector.extract_strided_slice %46 {offsets = [0, 0], sizes = [8, 128], strides = [1, 1]} : vector<8x512xf32> to vector<8x128xf32>
    %48 = arith.negf %47 : vector<8x128xf32>
    %49 = math.exp %48 : vector<8x128xf32>
    %cst_19 = arith.constant 1.000000e+00 : f32
    %50 = vector.broadcast %cst_19 : f32 to vector<8x128xf32>
    %51 = arith.addf %50, %49 : vector<8x128xf32>
    %52 = arith.divf %50, %51 : vector<8x128xf32>
    %53 = vector.extract_strided_slice %46 {offsets = [0, 128], sizes = [8, 128], strides = [1, 1]} : vector<8x512xf32> to vector<8x128xf32>
    %54 = arith.negf %53 : vector<8x128xf32>
    %55 = math.exp %54 : vector<8x128xf32>
    %cst_20 = arith.constant 1.000000e+00 : f32
    %56 = vector.broadcast %cst_20 : f32 to vector<8x128xf32>
    %57 = arith.addf %56, %55 : vector<8x128xf32>
    %58 = arith.divf %56, %57 : vector<8x128xf32>
    %59 = vector.extract_strided_slice %46 {offsets = [0, 256], sizes = [8, 128], strides = [1, 1]} : vector<8x512xf32> to vector<8x128xf32>
    %60 = math.tanh %59 : vector<8x128xf32>
    %61 = vector.extract_strided_slice %46 {offsets = [0, 384], sizes = [8, 128], strides = [1, 1]} : vector<8x512xf32> to vector<8x128xf32>
    %62 = arith.negf %61 : vector<8x128xf32>
    %63 = math.exp %62 : vector<8x128xf32>
    %cst_21 = arith.constant 1.000000e+00 : f32
    %64 = vector.broadcast %cst_21 : f32 to vector<8x128xf32>
    %65 = arith.addf %64, %63 : vector<8x128xf32>
    %66 = arith.divf %64, %65 : vector<8x128xf32>
    %67 = arith.mulf %58, %38 : vector<8x128xf32>
    %68 = arith.mulf %52, %60 : vector<8x128xf32>
    %69 = arith.addf %67, %68 : vector<8x128xf32>
    %70 = math.tanh %69 : vector<8x128xf32>
    %71 = arith.mulf %66, %70 : vector<8x128xf32>
    %c2_i32 = arith.constant 2 : i32
    %c8_i32_22 = arith.constant 8 : i32
    %72 = arith.muli %c2_i32, %c8_i32_22 : i32
    %73 = tpu.assume_multiple %72, 8 : i32
    %74 = arith.index_cast %73 : i32 to index
    %c0_23 = arith.constant 0 : index
    %75 = vector.load %arg7[%74, %c0_23] : memref<64x512xf32, #tpu.memory_space<vmem>>, vector<8x512xf32>
    %cst_24 = arith.constant dense<0.000000e+00> : vector<8x512xf32>
    %76 = tpu.matmul %71, %7, %cst_24 {dimension_numbers = #tpu.dot_dimension_numbers<[1], [0], [0], [1], [0, 0, 1, 1], [], []>} : vector<8x128xf32>, vector<128x512xf32>, vector<8x512xf32> -> vector<8x512xf32>
    %77 = arith.addf %75, %76 : vector<8x512xf32>
    %78 = vector.extract_strided_slice %77 {offsets = [0, 0], sizes = [8, 128], strides = [1, 1]} : vector<8x512xf32> to vector<8x128xf32>
    %79 = arith.negf %78 : vector<8x128xf32>
    %80 = math.exp %79 : vector<8x128xf32>
    %cst_25 = arith.constant 1.000000e+00 : f32
    %81 = vector.broadcast %cst_25 : f32 to vector<8x128xf32>
    %82 = arith.addf %81, %80 : vector<8x128xf32>
    %83 = arith.divf %81, %82 : vector<8x128xf32>
    %84 = vector.extract_strided_slice %77 {offsets = [0, 128], sizes = [8, 128], strides = [1, 1]} : vector<8x512xf32> to vector<8x128xf32>
    %85 = arith.negf %84 : vector<8x128xf32>
    %86 = math.exp %85 : vector<8x128xf32>
    %cst_26 = arith.constant 1.000000e+00 : f32
    %87 = vector.broadcast %cst_26 : f32 to vector<8x128xf32>
    %88 = arith.addf %87, %86 : vector<8x128xf32>
    %89 = arith.divf %87, %88 : vector<8x128xf32>
    %90 = vector.extract_strided_slice %77 {offsets = [0, 256], sizes = [8, 128], strides = [1, 1]} : vector<8x512xf32> to vector<8x128xf32>
    %91 = math.tanh %90 : vector<8x128xf32>
    %92 = vector.extract_strided_slice %77 {offsets = [0, 384], sizes = [8, 128], strides = [1, 1]} : vector<8x512xf32> to vector<8x128xf32>
    %93 = arith.negf %92 : vector<8x128xf32>
    %94 = math.exp %93 : vector<8x128xf32>
    %cst_27 = arith.constant 1.000000e+00 : f32
    %95 = vector.broadcast %cst_27 : f32 to vector<8x128xf32>
    %96 = arith.addf %95, %94 : vector<8x128xf32>
    %97 = arith.divf %95, %96 : vector<8x128xf32>
    %98 = arith.mulf %89, %69 : vector<8x128xf32>
    %99 = arith.mulf %83, %91 : vector<8x128xf32>
    %100 = arith.addf %98, %99 : vector<8x128xf32>
    %101 = math.tanh %100 : vector<8x128xf32>
    %102 = arith.mulf %97, %101 : vector<8x128xf32>
    %c3_i32 = arith.constant 3 : i32
    %c8_i32_28 = arith.constant 8 : i32
    %103 = arith.muli %c3_i32, %c8_i32_28 : i32
    %104 = tpu.assume_multiple %103, 8 : i32
    %105 = arith.index_cast %104 : i32 to index
    %c0_29 = arith.constant 0 : index
    %106 = vector.load %arg7[%105, %c0_29] : memref<64x512xf32, #tpu.memory_space<vmem>>, vector<8x512xf32>
    %cst_30 = arith.constant dense<0.000000e+00> : vector<8x512xf32>
    %107 = tpu.matmul %102, %7, %cst_30 {dimension_numbers = #tpu.dot_dimension_numbers<[1], [0], [0], [1], [0, 0, 1, 1], [], []>} : vector<8x128xf32>, vector<128x512xf32>, vector<8x512xf32> -> vector<8x512xf32>
    %108 = arith.addf %106, %107 : vector<8x512xf32>
    %109 = vector.extract_strided_slice %108 {offsets = [0, 0], sizes = [8, 128], strides = [1, 1]} : vector<8x512xf32> to vector<8x128xf32>
    %110 = arith.negf %109 : vector<8x128xf32>
    %111 = math.exp %110 : vector<8x128xf32>
    %cst_31 = arith.constant 1.000000e+00 : f32
    %112 = vector.broadcast %cst_31 : f32 to vector<8x128xf32>
    %113 = arith.addf %112, %111 : vector<8x128xf32>
    %114 = arith.divf %112, %113 : vector<8x128xf32>
    %115 = vector.extract_strided_slice %108 {offsets = [0, 128], sizes = [8, 128], strides = [1, 1]} : vector<8x512xf32> to vector<8x128xf32>
    %116 = arith.negf %115 : vector<8x128xf32>
    %117 = math.exp %116 : vector<8x128xf32>
    %cst_32 = arith.constant 1.000000e+00 : f32
    %118 = vector.broadcast %cst_32 : f32 to vector<8x128xf32>
    %119 = arith.addf %118, %117 : vector<8x128xf32>
    %120 = arith.divf %118, %119 : vector<8x128xf32>
    %121 = vector.extract_strided_slice %108 {offsets = [0, 256], sizes = [8, 128], strides = [1, 1]} : vector<8x512xf32> to vector<8x128xf32>
    %122 = math.tanh %121 : vector<8x128xf32>
    %123 = vector.extract_strided_slice %108 {offsets = [0, 384], sizes = [8, 128], strides = [1, 1]} : vector<8x512xf32> to vector<8x128xf32>
    %124 = arith.negf %123 : vector<8x128xf32>
    %125 = math.exp %124 : vector<8x128xf32>
    %cst_33 = arith.constant 1.000000e+00 : f32
    %126 = vector.broadcast %cst_33 : f32 to vector<8x128xf32>
    %127 = arith.addf %126, %125 : vector<8x128xf32>
    %128 = arith.divf %126, %127 : vector<8x128xf32>
    %129 = arith.mulf %120, %100 : vector<8x128xf32>
    %130 = arith.mulf %114, %122 : vector<8x128xf32>
    %131 = arith.addf %129, %130 : vector<8x128xf32>
    %132 = math.tanh %131 : vector<8x128xf32>
    %133 = arith.mulf %128, %132 : vector<8x128xf32>
    %c4_i32 = arith.constant 4 : i32
    %c8_i32_34 = arith.constant 8 : i32
    %134 = arith.muli %c4_i32, %c8_i32_34 : i32
    %135 = tpu.assume_multiple %134, 8 : i32
    %136 = arith.index_cast %135 : i32 to index
    %c0_35 = arith.constant 0 : index
    %137 = vector.load %arg7[%136, %c0_35] : memref<64x512xf32, #tpu.memory_space<vmem>>, vector<8x512xf32>
    %cst_36 = arith.constant dense<0.000000e+00> : vector<8x512xf32>
    %138 = tpu.matmul %133, %7, %cst_36 {dimension_numbers = #tpu.dot_dimension_numbers<[1], [0], [0], [1], [0, 0, 1, 1], [], []>} : vector<8x128xf32>, vector<128x512xf32>, vector<8x512xf32> -> vector<8x512xf32>
    %139 = arith.addf %137, %138 : vector<8x512xf32>
    %140 = vector.extract_strided_slice %139 {offsets = [0, 0], sizes = [8, 128], strides = [1, 1]} : vector<8x512xf32> to vector<8x128xf32>
    %141 = arith.negf %140 : vector<8x128xf32>
    %142 = math.exp %141 : vector<8x128xf32>
    %cst_37 = arith.constant 1.000000e+00 : f32
    %143 = vector.broadcast %cst_37 : f32 to vector<8x128xf32>
    %144 = arith.addf %143, %142 : vector<8x128xf32>
    %145 = arith.divf %143, %144 : vector<8x128xf32>
    %146 = vector.extract_strided_slice %139 {offsets = [0, 128], sizes = [8, 128], strides = [1, 1]} : vector<8x512xf32> to vector<8x128xf32>
    %147 = arith.negf %146 : vector<8x128xf32>
    %148 = math.exp %147 : vector<8x128xf32>
    %cst_38 = arith.constant 1.000000e+00 : f32
    %149 = vector.broadcast %cst_38 : f32 to vector<8x128xf32>
    %150 = arith.addf %149, %148 : vector<8x128xf32>
    %151 = arith.divf %149, %150 : vector<8x128xf32>
    %152 = vector.extract_strided_slice %139 {offsets = [0, 256], sizes = [8, 128], strides = [1, 1]} : vector<8x512xf32> to vector<8x128xf32>
    %153 = math.tanh %152 : vector<8x128xf32>
    %154 = vector.extract_strided_slice %139 {offsets = [0, 384], sizes = [8, 128], strides = [1, 1]} : vector<8x512xf32> to vector<8x128xf32>
    %155 = arith.negf %154 : vector<8x128xf32>
    %156 = math.exp %155 : vector<8x128xf32>
    %cst_39 = arith.constant 1.000000e+00 : f32
    %157 = vector.broadcast %cst_39 : f32 to vector<8x128xf32>
    %158 = arith.addf %157, %156 : vector<8x128xf32>
    %159 = arith.divf %157, %158 : vector<8x128xf32>
    %160 = arith.mulf %151, %131 : vector<8x128xf32>
    %161 = arith.mulf %145, %153 : vector<8x128xf32>
    %162 = arith.addf %160, %161 : vector<8x128xf32>
    %163 = math.tanh %162 : vector<8x128xf32>
    %164 = arith.mulf %159, %163 : vector<8x128xf32>
    %c5_i32 = arith.constant 5 : i32
    %c8_i32_40 = arith.constant 8 : i32
    %165 = arith.muli %c5_i32, %c8_i32_40 : i32
    %166 = tpu.assume_multiple %165, 8 : i32
    %167 = arith.index_cast %166 : i32 to index
    %c0_41 = arith.constant 0 : index
    %168 = vector.load %arg7[%167, %c0_41] : memref<64x512xf32, #tpu.memory_space<vmem>>, vector<8x512xf32>
    %cst_42 = arith.constant dense<0.000000e+00> : vector<8x512xf32>
    %169 = tpu.matmul %164, %7, %cst_42 {dimension_numbers = #tpu.dot_dimension_numbers<[1], [0], [0], [1], [0, 0, 1, 1], [], []>} : vector<8x128xf32>, vector<128x512xf32>, vector<8x512xf32> -> vector<8x512xf32>
    %170 = arith.addf %168, %169 : vector<8x512xf32>
    %171 = vector.extract_strided_slice %170 {offsets = [0, 0], sizes = [8, 128], strides = [1, 1]} : vector<8x512xf32> to vector<8x128xf32>
    %172 = arith.negf %171 : vector<8x128xf32>
    %173 = math.exp %172 : vector<8x128xf32>
    %cst_43 = arith.constant 1.000000e+00 : f32
    %174 = vector.broadcast %cst_43 : f32 to vector<8x128xf32>
    %175 = arith.addf %174, %173 : vector<8x128xf32>
    %176 = arith.divf %174, %175 : vector<8x128xf32>
    %177 = vector.extract_strided_slice %170 {offsets = [0, 128], sizes = [8, 128], strides = [1, 1]} : vector<8x512xf32> to vector<8x128xf32>
    %178 = arith.negf %177 : vector<8x128xf32>
    %179 = math.exp %178 : vector<8x128xf32>
    %cst_44 = arith.constant 1.000000e+00 : f32
    %180 = vector.broadcast %cst_44 : f32 to vector<8x128xf32>
    %181 = arith.addf %180, %179 : vector<8x128xf32>
    %182 = arith.divf %180, %181 : vector<8x128xf32>
    %183 = vector.extract_strided_slice %170 {offsets = [0, 256], sizes = [8, 128], strides = [1, 1]} : vector<8x512xf32> to vector<8x128xf32>
    %184 = math.tanh %183 : vector<8x128xf32>
    %185 = vector.extract_strided_slice %170 {offsets = [0, 384], sizes = [8, 128], strides = [1, 1]} : vector<8x512xf32> to vector<8x128xf32>
    %186 = arith.negf %185 : vector<8x128xf32>
    %187 = math.exp %186 : vector<8x128xf32>
    %cst_45 = arith.constant 1.000000e+00 : f32
    %188 = vector.broadcast %cst_45 : f32 to vector<8x128xf32>
    %189 = arith.addf %188, %187 : vector<8x128xf32>
    %190 = arith.divf %188, %189 : vector<8x128xf32>
    %191 = arith.mulf %182, %162 : vector<8x128xf32>
    %192 = arith.mulf %176, %184 : vector<8x128xf32>
    %193 = arith.addf %191, %192 : vector<8x128xf32>
    %194 = math.tanh %193 : vector<8x128xf32>
    %195 = arith.mulf %190, %194 : vector<8x128xf32>
    %c6_i32 = arith.constant 6 : i32
    %c8_i32_46 = arith.constant 8 : i32
    %196 = arith.muli %c6_i32, %c8_i32_46 : i32
    %197 = tpu.assume_multiple %196, 8 : i32
    %198 = arith.index_cast %197 : i32 to index
    %c0_47 = arith.constant 0 : index
    %199 = vector.load %arg7[%198, %c0_47] : memref<64x512xf32, #tpu.memory_space<vmem>>, vector<8x512xf32>
    %cst_48 = arith.constant dense<0.000000e+00> : vector<8x512xf32>
    %200 = tpu.matmul %195, %7, %cst_48 {dimension_numbers = #tpu.dot_dimension_numbers<[1], [0], [0], [1], [0, 0, 1, 1], [], []>} : vector<8x128xf32>, vector<128x512xf32>, vector<8x512xf32> -> vector<8x512xf32>
    %201 = arith.addf %199, %200 : vector<8x512xf32>
    %202 = vector.extract_strided_slice %201 {offsets = [0, 0], sizes = [8, 128], strides = [1, 1]} : vector<8x512xf32> to vector<8x128xf32>
    %203 = arith.negf %202 : vector<8x128xf32>
    %204 = math.exp %203 : vector<8x128xf32>
    %cst_49 = arith.constant 1.000000e+00 : f32
    %205 = vector.broadcast %cst_49 : f32 to vector<8x128xf32>
    %206 = arith.addf %205, %204 : vector<8x128xf32>
    %207 = arith.divf %205, %206 : vector<8x128xf32>
    %208 = vector.extract_strided_slice %201 {offsets = [0, 128], sizes = [8, 128], strides = [1, 1]} : vector<8x512xf32> to vector<8x128xf32>
    %209 = arith.negf %208 : vector<8x128xf32>
    %210 = math.exp %209 : vector<8x128xf32>
    %cst_50 = arith.constant 1.000000e+00 : f32
    %211 = vector.broadcast %cst_50 : f32 to vector<8x128xf32>
    %212 = arith.addf %211, %210 : vector<8x128xf32>
    %213 = arith.divf %211, %212 : vector<8x128xf32>
    %214 = vector.extract_strided_slice %201 {offsets = [0, 256], sizes = [8, 128], strides = [1, 1]} : vector<8x512xf32> to vector<8x128xf32>
    %215 = math.tanh %214 : vector<8x128xf32>
    %216 = vector.extract_strided_slice %201 {offsets = [0, 384], sizes = [8, 128], strides = [1, 1]} : vector<8x512xf32> to vector<8x128xf32>
    %217 = arith.negf %216 : vector<8x128xf32>
    %218 = math.exp %217 : vector<8x128xf32>
    %cst_51 = arith.constant 1.000000e+00 : f32
    %219 = vector.broadcast %cst_51 : f32 to vector<8x128xf32>
    %220 = arith.addf %219, %218 : vector<8x128xf32>
    %221 = arith.divf %219, %220 : vector<8x128xf32>
    %222 = arith.mulf %213, %193 : vector<8x128xf32>
    %223 = arith.mulf %207, %215 : vector<8x128xf32>
    %224 = arith.addf %222, %223 : vector<8x128xf32>
    %225 = math.tanh %224 : vector<8x128xf32>
    %226 = arith.mulf %221, %225 : vector<8x128xf32>
    %c7_i32 = arith.constant 7 : i32
    %c8_i32_52 = arith.constant 8 : i32
    %227 = arith.muli %c7_i32, %c8_i32_52 : i32
    %228 = tpu.assume_multiple %227, 8 : i32
    %229 = arith.index_cast %228 : i32 to index
    %c0_53 = arith.constant 0 : index
    %230 = vector.load %arg7[%229, %c0_53] : memref<64x512xf32, #tpu.memory_space<vmem>>, vector<8x512xf32>
    %cst_54 = arith.constant dense<0.000000e+00> : vector<8x512xf32>
    %231 = tpu.matmul %226, %7, %cst_54 {dimension_numbers = #tpu.dot_dimension_numbers<[1], [0], [0], [1], [0, 0, 1, 1], [], []>} : vector<8x128xf32>, vector<128x512xf32>, vector<8x512xf32> -> vector<8x512xf32>
    %232 = arith.addf %230, %231 : vector<8x512xf32>
    %233 = vector.extract_strided_slice %232 {offsets = [0, 0], sizes = [8, 128], strides = [1, 1]} : vector<8x512xf32> to vector<8x128xf32>
    %234 = arith.negf %233 : vector<8x128xf32>
    %235 = math.exp %234 : vector<8x128xf32>
    %cst_55 = arith.constant 1.000000e+00 : f32
    %236 = vector.broadcast %cst_55 : f32 to vector<8x128xf32>
    %237 = arith.addf %236, %235 : vector<8x128xf32>
    %238 = arith.divf %236, %237 : vector<8x128xf32>
    %239 = vector.extract_strided_slice %232 {offsets = [0, 128], sizes = [8, 128], strides = [1, 1]} : vector<8x512xf32> to vector<8x128xf32>
    %240 = arith.negf %239 : vector<8x128xf32>
    %241 = math.exp %240 : vector<8x128xf32>
    %cst_56 = arith.constant 1.000000e+00 : f32
    %242 = vector.broadcast %cst_56 : f32 to vector<8x128xf32>
    %243 = arith.addf %242, %241 : vector<8x128xf32>
    %244 = arith.divf %242, %243 : vector<8x128xf32>
    %245 = vector.extract_strided_slice %232 {offsets = [0, 256], sizes = [8, 128], strides = [1, 1]} : vector<8x512xf32> to vector<8x128xf32>
    %246 = math.tanh %245 : vector<8x128xf32>
    %247 = vector.extract_strided_slice %232 {offsets = [0, 384], sizes = [8, 128], strides = [1, 1]} : vector<8x512xf32> to vector<8x128xf32>
    %248 = arith.negf %247 : vector<8x128xf32>
    %249 = math.exp %248 : vector<8x128xf32>
    %cst_57 = arith.constant 1.000000e+00 : f32
    %250 = vector.broadcast %cst_57 : f32 to vector<8x128xf32>
    %251 = arith.addf %250, %249 : vector<8x128xf32>
    %252 = arith.divf %250, %251 : vector<8x128xf32>
    %253 = arith.mulf %244, %224 : vector<8x128xf32>
    %254 = arith.mulf %238, %246 : vector<8x128xf32>
    %255 = arith.addf %253, %254 : vector<8x128xf32>
    %256 = math.tanh %255 : vector<8x128xf32>
    %257 = arith.mulf %252, %256 : vector<8x128xf32>
    %c8_i32_58 = arith.constant 8 : i32
    %c0_59 = arith.constant 0 : index
    %c0_60 = arith.constant 0 : index
    %258 = vector.load %arg4[%c0_59, %c0_60] : memref<128x128xf32, #tpu.memory_space<vmem>>, vector<128x128xf32>
    %cst_61 = arith.constant dense<0.000000e+00> : vector<8x128xf32>
    %259 = tpu.matmul %257, %258, %cst_61 {dimension_numbers = #tpu.dot_dimension_numbers<[1], [0], [0], [1], [0, 0, 1, 1], [], []>} : vector<8x128xf32>, vector<128x128xf32>, vector<8x128xf32> -> vector<8x128xf32>
    %c0_62 = arith.constant 0 : index
    %c0_63 = arith.constant 0 : index
    %260 = vector.load %arg5[%c0_62, %c0_63] : memref<1x128xf32, #tpu.memory_space<vmem>>, vector<1x128xf32>
    %261 = vector.broadcast %260 : vector<1x128xf32> to vector<8x128xf32>
    %262 = arith.addf %259, %261 : vector<8x128xf32>
    %c0_64 = arith.constant 0 : index
    %c0_65 = arith.constant 0 : index
    %263 = vector.load %arg6[%c0_64, %c0_65] : memref<8x128xf32, #tpu.memory_space<vmem>>, vector<8x128xf32>
    tpu.vector_store %arg6[%c0_64, %c0_65], %262 {strides = array<i32>} : memref<8x128xf32, #tpu.memory_space<vmem>>, vector<8x128xf32>,
    return
  }
}

</mosaic_0001>

<llo_original>
// kernel: tpu_custom_call.1
$region0: #{tpu_custom_call.1}
  #allocation0 [shape = 'u32[]', space=smem, size = 0x4, offset = 0x4, fixed_abs, tag = 'smem constant byte address 0x4 - core index']
  #allocation1 [shape = 'u32[72,128]{1,0:T(1,128)}', space=vmem, size = 0x9000, scoped, tag = 'internal scratch']
  #allocation2 [shape = 'f32[64,512]{1,0:T(8,128)}', space=vmem, size = 0x20000, scoped, tag = 'scratch operand']
  %s0 = inlined_call_operand.vmem [shape: f32[64,28], index: 0, kind: input, shape index: {}]
  %s1 = inlined_call_operand.hbm [shape: f32[28,512], index: 1, kind: input, shape index: {}]
  %s2 = inlined_call_operand.hbm [shape: f32[128,512], index: 2, kind: input, shape index: {}]
  %s3 = inlined_call_operand.vmem [shape: f32[1,512], index: 3, kind: input, shape index: {}]
  %s4 = inlined_call_operand.hbm [shape: f32[128,128], index: 4, kind: input, shape index: {}]
  %s5 = inlined_call_operand.vmem [shape: f32[1,128], index: 5, kind: input, shape index: {}]
  %s6 = inlined_call_operand.hbm [shape: f32[8,128], index: 6, kind: output, shape index: {}]
  %s7 = sld [smem:[#allocation0]]
  $region46: #{tpu_custom_call.1} parent=0
    _
  %s9 = ssub.s32 1, %s7
  %s10 = scalar_select 0, %s9, %s7
  $region1: #{tpu_custom_call.1} parent=0
    #allocation3 [shape = 'u8[65536]{0}', space=vmem, size = 0x10000, scoped, tag = 'input window, operand 1, single buffered']
    #allocation4 [shape = 's32[1]{0}', space=sflag, size = 0x4, scoped, tag = 'scoped memory for tpu_custom_call.1']
    #allocation5 [shape = 's32[1]{0}', space=sflag, size = 0x4, scoped, tag = 'scoped memory for tpu_custom_call.1']
    #allocation6 [shape = 'u8[262144]{0}', space=vmem, size = 0x40000, scoped, tag = 'input window, operand 2, single buffered']
    #allocation7 [shape = 's32[1]{0}', space=sflag, size = 0x4, scoped, tag = 'scoped memory for tpu_custom_call.1']
    #allocation8 [shape = 'u8[65536]{0}', space=vmem, size = 0x10000, scoped, tag = 'input window, operand 4, single buffered']
    #allocation9 [shape = 'u8[4096]{0}', space=vmem, size = 0x1000, scoped, tag = 'output window, operand 0, single buffered']
    %11 = vsyncpa [#allocation4], 0
    %12 = vsyncpa [#allocation7], 0
    %13 = vsyncpa [#allocation5], 0
    // Predicated region
    $region2: #{tpu_custom_call.1} parent=1 // pred_check
      _
    $region3: #{tpu_custom_call.1} parent=1 // pred_check_branch
      %15 = sbr.rel (0) target = $region5
    $region4: #{tpu_custom_call.1} parent=1 // pred_region
      _
    $region5: #{tpu_custom_call.1} parent=1 // pred_fallthru
      _
    // Predicated region
    $region6: #{tpu_custom_call.1} parent=1 // pred_check
      _
    $region7: #{tpu_custom_call.1} parent=1 // pred_check_branch
      %17 = sbr.rel (0) target = $region9
    $region8: #{tpu_custom_call.1} parent=1 // pred_region
      %19 = vsyncadd [#allocation4], 0
      %s20 = sshll.u32 %s1, 4
      %s21 = int_to_ptr.hbm [resolvable:$true] %s20
      %s22 = sshll.u32 [#allocation3], 4
      %s23 = int_to_ptr.vmem [resolvable:$true] %s22
      %28 = dma.hbm_to_vmem [thread:$0]  %s21, 2048, %s23, [#allocation4], 512, 512, 32
    $region9: #{tpu_custom_call.1} parent=1 // pred_fallthru
      _
    // Predicated region
    $region10: #{tpu_custom_call.1} parent=1 // pred_check
      _
    $region11: #{tpu_custom_call.1} parent=1 // pred_check_branch
      %30 = sbr.rel (0) target = $region13
    $region12: #{tpu_custom_call.1} parent=1 // pred_region
      %32 = vsyncadd [#allocation7], 0
      %s33 = sshll.u32 %s2, 4
      %s34 = int_to_ptr.hbm [resolvable:$true] %s33
      %s35 = sshll.u32 [#allocation6], 4
      %s36 = int_to_ptr.vmem [resolvable:$true] %s35
      %41 = dma.hbm_to_vmem [thread:$0]  %s34, 8192, %s36, [#allocation7], 512, 512, 32
    $region13: #{tpu_custom_call.1} parent=1 // pred_fallthru
      _
    // Predicated region
    $region14: #{tpu_custom_call.1} parent=1 // pred_check
      _
    $region15: #{tpu_custom_call.1} parent=1 // pred_check_branch
      %43 = sbr.rel (0) target = $region17
    $region16: #{tpu_custom_call.1} parent=1 // pred_region
      _
    $region17: #{tpu_custom_call.1} parent=1 // pred_fallthru
      _
    // Predicated region
    $region18: #{tpu_custom_call.1} parent=1 // pred_check
      _
    $region19: #{tpu_custom_call.1} parent=1 // pred_check_branch
      %45 = sbr.rel (0) target = $region21
    $region20: #{tpu_custom_call.1} parent=1 // pred_region
      %47 = vsyncadd [#allocation7], 0
      %s48 = sshll.u32 %s4, 4
      %s49 = int_to_ptr.hbm [resolvable:$true] %s48
      %s50 = sshll.u32 [#allocation8], 4
      %s51 = int_to_ptr.vmem [resolvable:$true] %s50
      %56 = dma.hbm_to_vmem [thread:$0]  %s49, 2048, %s51, [#allocation7], 128, 128, 8
    $region21: #{tpu_custom_call.1} parent=1 // pred_fallthru
      _
    // Predicated region
    $region22: #{tpu_custom_call.1} parent=1 // pred_check
      _
    $region23: #{tpu_custom_call.1} parent=1 // pred_check_branch
      %58 = sbr.rel (0) target = $region25
    $region24: #{tpu_custom_call.1} parent=1 // pred_region
      _
    $region25: #{tpu_custom_call.1} parent=1 // pred_fallthru
      _
    // Predicated region
    $region26: #{tpu_custom_call.1} parent=1 // pred_check
      _
    $region27: #{tpu_custom_call.1} parent=1 // pred_check_branch
      %60 = sbr.rel (0) target = $region29
    $region28: #{tpu_custom_call.1} parent=1 // pred_region
      %62 = dma.done [#allocation4], 2048
    $region29: #{tpu_custom_call.1} parent=1 // pred_fallthru
      _
    // Predicated region
    $region30: #{tpu_custom_call.1} parent=1 // pred_check
      _
    $region31: #{tpu_custom_call.1} parent=1 // pred_check_branch
      %64 = sbr.rel (0) target = $region33
    $region32: #{tpu_custom_call.1} parent=1 // pred_region
      %66 = dma.done [#allocation7], 8192
    $region33: #{tpu_custom_call.1} parent=1 // pred_fallthru
      _
    // Predicated region
    $region34: #{tpu_custom_call.1} parent=1 // pred_check
      _
    $region35: #{tpu_custom_call.1} parent=1 // pred_check_branch
      %68 = sbr.rel (0) target = $region37
    $region36: #{tpu_custom_call.1} parent=1 // pred_region
      %70 = dma.done [#allocation7], 2048
    $region37: #{tpu_custom_call.1} parent=1 // pred_fallthru
      _
    %v71 = vld [vmem:[%s0] sm:$0xff]
    %v72 = vld [vmem:[%s0 + $0x8] sm:$0xff]
    %v73 = vld [vmem:[%s0 + $0x10] sm:$0xff]
    %v74 = vld [vmem:[%s0 + $0x18] sm:$0xff]
    %v75 = vld [vmem:[%s0 + $0x20] sm:$0xff]
    %v76 = vld [vmem:[%s0 + $0x28] sm:$0xff]
    %v77 = vld [vmem:[%s0 + $0x30] sm:$0xff]
    %v78 = vld [vmem:[%s0 + $0x38] sm:$0xff]
    %v79 = vld [vmem:[#allocation3] sm:$0xff]
    %v80 = vld [vmem:[#allocation3 + $0x8] sm:$0xff]
    %v81 = vld [vmem:[#allocation3 + $0x10] sm:$0xff]
    %v82 = vld [vmem:[#allocation3 + $0x18] sm:$0xff]
    %v83 = vld [vmem:[#allocation3 + $0x20] sm:$0xff]
    %v84 = vld [vmem:[#allocation3 + $0x28] sm:$0xff]
    %v85 = vld [vmem:[#allocation3 + $0x30] sm:$0xff]
    %v86 = vld [vmem:[#allocation3 + $0x38] sm:$0xff]
    %v87 = vld [vmem:[#allocation3 + $0x40] sm:$0xff]
    %v88 = vld [vmem:[#allocation3 + $0x48] sm:$0xff]
    %v89 = vld [vmem:[#allocation3 + $0x50] sm:$0xff]
    %v90 = vld [vmem:[#allocation3 + $0x58] sm:$0xff]
    %v91 = vld [vmem:[#allocation3 + $0x60] sm:$0xf]
    %v92 = vld [vmem:[#allocation3 + $0x68] sm:$0xf]
    %v93 = vld [vmem:[#allocation3 + $0x70] sm:$0xf]
    %v94 = vld [vmem:[#allocation3 + $0x78] sm:$0xf]
    %v95 = vld [vmem:[%s3] sm:$0xf]
    %v97 = vperm.slane %v95, 0
    %v98 = vperm.slane %v95, 1
    %v99 = vperm.slane %v95, 2
    %v100 = vperm.slane %v95, 3
    %vm105 = vcmask 228352
    %v107 = vsel %vm105, %v71, 0
    %v110 = vsel %vm105, %v72, 0
    %v113 = vsel %vm105, %v73, 0
    %v116 = vsel %vm105, %v74, 0
    %v119 = vsel %vm105, %v75, 0
    %v122 = vsel %vm105, %v76, 0
    %v125 = vsel %vm105, %v77, 0
    %v128 = vsel %vm105, %v78, 0
    %vm130 = vcmask 1043456
    %v132 = vsel %vm130, %v91, 0
    %v135 = vsel %vm130, %v92, 0
    %v138 = vsel %vm130, %v93, 0
    %v141 = vsel %vm130, %v94, 0
    %143 = vmatpush.msra.mxu0 0.0
    %144 = vmatpush.msra.mxu0 0.0
    %145 = vmatpush.msra.mxu0 0.0
    %146 = vmatpush.msra.mxu0 0.0
    %147 = vmatpush.msra.mxu0 0.0
    %148 = vmatpush.msra.mxu0 0.0
    %149 = vmatpush.msra.mxu0 0.0
    %150 = vmatpush.msra.mxu0 0.0
    %151 = vmatpush.msra.mxu0 0.0
    %152 = vmatpush.msra.mxu0 0.0
    %153 = vmatpush.msra.mxu0 0.0
    %154 = vmatpush.msra.mxu0 0.0
    %155 = vmatpush.msra.mxu0 %v132
    %156 = vmatpush.msra.mxu0 %v87
    %157 = vmatpush.msra.mxu0 %v83
    %158 = vmatpush.msra.mxu0 %v79
    %159 = vmatmul.f32.gmra.mxu0 %v107
    %v160 = vpop.f32.mrf.mxu0
    %v161 = vadd.f32 %v97, %v160
    %162 = vmatmul.f32.gmra.mxu0 %v110
    %v163 = vpop.f32.mrf.mxu0
    %v164 = vadd.f32 %v97, %v163
    %165 = vmatmul.f32.gmra.mxu0 %v113
    %v166 = vpop.f32.mrf.mxu0
    %v167 = vadd.f32 %v97, %v166
    %168 = vmatmul.f32.gmra.mxu0 %v116
    %v169 = vpop.f32.mrf.mxu0
    %v170 = vadd.f32 %v97, %v169
    %171 = vmatmul.f32.gmra.mxu0 %v119
    %v172 = vpop.f32.mrf.mxu0
    %v173 = vadd.f32 %v97, %v172
    %174 = vmatmul.f32.gmra.mxu0 %v122
    %v175 = vpop.f32.mrf.mxu0
    %v176 = vadd.f32 %v97, %v175
    %177 = vmatmul.f32.gmra.mxu0 %v125
    %v178 = vpop.f32.mrf.mxu0
    %v179 = vadd.f32 %v97, %v178
    %180 = vmatmul.f32.gmra.mxu0 %v128
    %v181 = vpop.f32.mrf.mxu0
    %v182 = vadd.f32 %v97, %v181
    %183 = vdwg.mxu0
    %184 = vmatpush.msra.mxu0 0.0
    %185 = vmatpush.msra.mxu0 0.0
    %186 = vmatpush.msra.mxu0 0.0
    %187 = vmatpush.msra.mxu0 0.0
    %188 = vmatpush.msra.mxu0 0.0
    %189 = vmatpush.msra.mxu0 0.0
    %190 = vmatpush.msra.mxu0 0.0
    %191 = vmatpush.msra.mxu0 0.0
    %192 = vmatpush.msra.mxu0 0.0
    %193 = vmatpush.msra.mxu0 0.0
    %194 = vmatpush.msra.mxu0 0.0
    %195 = vmatpush.msra.mxu0 0.0
    %196 = vmatpush.msra.mxu0 %v135
    %197 = vmatpush.msra.mxu0 %v88
    %198 = vmatpush.msra.mxu0 %v84
    %199 = vmatpush.msra.mxu0 %v80
    %200 = vmatmul.f32.gmra.mxu0 %v107
    %v201 = vpop.f32.mrf.mxu0
    %v202 = vadd.f32 %v98, %v201
    %203 = vmatmul.f32.gmra.mxu0 %v110
    %v204 = vpop.f32.mrf.mxu0
    %v205 = vadd.f32 %v98, %v204
    %206 = vmatmul.f32.gmra.mxu0 %v113
    %v207 = vpop.f32.mrf.mxu0
    %v208 = vadd.f32 %v98, %v207
    %209 = vmatmul.f32.gmra.mxu0 %v116
    %v210 = vpop.f32.mrf.mxu0
    %v211 = vadd.f32 %v98, %v210
    %212 = vmatmul.f32.gmra.mxu0 %v119
    %v213 = vpop.f32.mrf.mxu0
    %v214 = vadd.f32 %v98, %v213
    %215 = vmatmul.f32.gmra.mxu0 %v122
    %v216 = vpop.f32.mrf.mxu0
    %v217 = vadd.f32 %v98, %v216
    %218 = vmatmul.f32.gmra.mxu0 %v125
    %v219 = vpop.f32.mrf.mxu0
    %v220 = vadd.f32 %v98, %v219
    %221 = vmatmul.f32.gmra.mxu0 %v128
    %v222 = vpop.f32.mrf.mxu0
    %v223 = vadd.f32 %v98, %v222
    %224 = vdwg.mxu0
    %225 = vmatpush.msra.mxu0 0.0
    %226 = vmatpush.msra.mxu0 0.0
    %227 = vmatpush.msra.mxu0 0.0
    %228 = vmatpush.msra.mxu0 0.0
    %229 = vmatpush.msra.mxu0 0.0
    %230 = vmatpush.msra.mxu0 0.0
    %231 = vmatpush.msra.mxu0 0.0
    %232 = vmatpush.msra.mxu0 0.0
    %233 = vmatpush.msra.mxu0 0.0
    %234 = vmatpush.msra.mxu0 0.0
    %235 = vmatpush.msra.mxu0 0.0
    %236 = vmatpush.msra.mxu0 0.0
    %237 = vmatpush.msra.mxu0 %v138
    %238 = vmatpush.msra.mxu0 %v89
    %239 = vmatpush.msra.mxu0 %v85
    %240 = vmatpush.msra.mxu0 %v81
    %241 = vmatmul.f32.gmra.mxu0 %v107
    %v242 = vpop.f32.mrf.mxu0
    %v243 = vadd.f32 %v99, %v242
    %244 = vmatmul.f32.gmra.mxu0 %v110
    %v245 = vpop.f32.mrf.mxu0
    %v246 = vadd.f32 %v99, %v245
    %247 = vmatmul.f32.gmra.mxu0 %v113
    %v248 = vpop.f32.mrf.mxu0
    %v249 = vadd.f32 %v99, %v248
    %250 = vmatmul.f32.gmra.mxu0 %v116
    %v251 = vpop.f32.mrf.mxu0
    %v252 = vadd.f32 %v99, %v251
    %253 = vmatmul.f32.gmra.mxu0 %v119
    %v254 = vpop.f32.mrf.mxu0
    %v255 = vadd.f32 %v99, %v254
    %256 = vmatmul.f32.gmra.mxu0 %v122
    %v257 = vpop.f32.mrf.mxu0
    %v258 = vadd.f32 %v99, %v257
    %259 = vmatmul.f32.gmra.mxu0 %v125
    %v260 = vpop.f32.mrf.mxu0
    %v261 = vadd.f32 %v99, %v260
    %262 = vmatmul.f32.gmra.mxu0 %v128
    %v263 = vpop.f32.mrf.mxu0
    %v264 = vadd.f32 %v99, %v263
    %265 = vdwg.mxu0
    %266 = vmatpush.msra.mxu0 0.0
    %267 = vmatpush.msra.mxu0 0.0
    %268 = vmatpush.msra.mxu0 0.0
    %269 = vmatpush.msra.mxu0 0.0
    %270 = vmatpush.msra.mxu0 0.0
    %271 = vmatpush.msra.mxu0 0.0
    %272 = vmatpush.msra.mxu0 0.0
    %273 = vmatpush.msra.mxu0 0.0
    %274 = vmatpush.msra.mxu0 0.0
    %275 = vmatpush.msra.mxu0 0.0
    %276 = vmatpush.msra.mxu0 0.0
    %277 = vmatpush.msra.mxu0 0.0
    %278 = vmatpush.msra.mxu0 %v141
    %279 = vmatpush.msra.mxu0 %v90
    %280 = vmatpush.msra.mxu0 %v86
    %281 = vmatpush.msra.mxu0 %v82
    %282 = vmatmul.f32.gmra.mxu0 %v107
    %v283 = vpop.f32.mrf.mxu0
    %v284 = vadd.f32 %v100, %v283
    %285 = vmatmul.f32.gmra.mxu0 %v110
    %v286 = vpop.f32.mrf.mxu0
    %v287 = vadd.f32 %v100, %v286
    %288 = vmatmul.f32.gmra.mxu0 %v113
    %v289 = vpop.f32.mrf.mxu0
    %v290 = vadd.f32 %v100, %v289
    %291 = vmatmul.f32.gmra.mxu0 %v116
    %v292 = vpop.f32.mrf.mxu0
    %v293 = vadd.f32 %v100, %v292
    %294 = vmatmul.f32.gmra.mxu0 %v119
    %v295 = vpop.f32.mrf.mxu0
    %v296 = vadd.f32 %v100, %v295
    %297 = vmatmul.f32.gmra.mxu0 %v122
    %v298 = vpop.f32.mrf.mxu0
    %v299 = vadd.f32 %v100, %v298
    %300 = vmatmul.f32.gmra.mxu0 %v125
    %v301 = vpop.f32.mrf.mxu0
    %v302 = vadd.f32 %v100, %v301
    %303 = vmatmul.f32.gmra.mxu0 %v128
    %v304 = vpop.f32.mrf.mxu0
    %v305 = vadd.f32 %v100, %v304
    %306 = vdwg.mxu0
    %307 = vst [vmem:[#allocation2] sm:$0xff] %v161
    %308 = vst [vmem:[#allocation2 + $0x8] sm:$0xff] %v202
    %309 = vst [vmem:[#allocation2 + $0x10] sm:$0xff] %v243
    %310 = vst [vmem:[#allocation2 + $0x18] sm:$0xff] %v284
    %311 = vst [vmem:[#allocation2 + $0x20] sm:$0xff] %v164
    %312 = vst [vmem:[#allocation2 + $0x28] sm:$0xff] %v205
    %313 = vst [vmem:[#allocation2 + $0x30] sm:$0xff] %v246
    %314 = vst [vmem:[#allocation2 + $0x38] sm:$0xff] %v287
    %315 = vst [vmem:[#allocation2 + $0x40] sm:$0xff] %v167
    %316 = vst [vmem:[#allocation2 + $0x48] sm:$0xff] %v208
    %317 = vst [vmem:[#allocation2 + $0x50] sm:$0xff] %v249
    %318 = vst [vmem:[#allocation2 + $0x58] sm:$0xff] %v290
    %319 = vst [vmem:[#allocation2 + $0x60] sm:$0xff] %v170
    %320 = vst [vmem:[#allocation2 + $0x68] sm:$0xff] %v211
    %321 = vst [vmem:[#allocation2 + $0x70] sm:$0xff] %v252
    %322 = vst [vmem:[#allocation2 + $0x78] sm:$0xff] %v293
    %323 = vst [vmem:[#allocation2 + $0x80] sm:$0xff] %v173
    %324 = vst [vmem:[#allocation2 + $0x88] sm:$0xff] %v214
    %325 = vst [vmem:[#allocation2 + $0x90] sm:$0xff] %v255
    %326 = vst [vmem:[#allocation2 + $0x98] sm:$0xff] %v296
    %327 = vst [vmem:[#allocation2 + $0xa0] sm:$0xff] %v176
    %328 = vst [vmem:[#allocation2 + $0xa8] sm:$0xff] %v217
    %329 = vst [vmem:[#allocation2 + $0xb0] sm:$0xff] %v258
    %330 = vst [vmem:[#allocation2 + $0xb8] sm:$0xff] %v299
    %331 = vst [vmem:[#allocation2 + $0xc0] sm:$0xff] %v179
    %332 = vst [vmem:[#allocation2 + $0xc8] sm:$0xff] %v220
    %333 = vst [vmem:[#allocation2 + $0xd0] sm:$0xff] %v261
    %334 = vst [vmem:[#allocation2 + $0xd8] sm:$0xff] %v302
    %335 = vst [vmem:[#allocation2 + $0xe0] sm:$0xff] %v182
    %336 = vst [vmem:[#allocation2 + $0xe8] sm:$0xff] %v223
    %337 = vst [vmem:[#allocation2 + $0xf0] sm:$0xff] %v264
    %338 = vst [vmem:[#allocation2 + $0xf8] sm:$0xff] %v305
    %v339 = vld [vmem:[#allocation6] sm:$0xff]
    %v340 = vld [vmem:[#allocation6 + $0x8] sm:$0xff]
    %v341 = vld [vmem:[#allocation6 + $0x10] sm:$0xff]
    %v342 = vld [vmem:[#allocation6 + $0x18] sm:$0xff]
    %v343 = vld [vmem:[#allocation6 + $0x20] sm:$0xff]
    %v344 = vld [vmem:[#allocation6 + $0x28] sm:$0xff]
    %v345 = vld [vmem:[#allocation6 + $0x30] sm:$0xff]
    %v346 = vld [vmem:[#allocation6 + $0x38] sm:$0xff]
    %v347 = vld [vmem:[#allocation6 + $0x40] sm:$0xff]
    %v348 = vld [vmem:[#allocation6 + $0x48] sm:$0xff]
    %v349 = vld [vmem:[#allocation6 + $0x50] sm:$0xff]
    %v350 = vld [vmem:[#allocation6 + $0x58] sm:$0xff]
    %v351 = vld [vmem:[#allocation6 + $0x60] sm:$0xff]
    %v352 = vld [vmem:[#allocation6 + $0x68] sm:$0xff]
    %v353 = vld [vmem:[#allocation6 + $0x70] sm:$0xff]
    %v354 = vld [vmem:[#allocation6 + $0x78] sm:$0xff]
    %v355 = vld [vmem:[#allocation6 + $0x80] sm:$0xff]
    %v356 = vld [vmem:[#allocation6 + $0x88] sm:$0xff]
    %v357 = vld [vmem:[#allocation6 + $0x90] sm:$0xff]
    %v358 = vld [vmem:[#allocation6 + $0x98] sm:$0xff]
    %v359 = vld [vmem:[#allocation6 + $0xa0] sm:$0xff]
    %v360 = vld [vmem:[#allocation6 + $0xa8] sm:$0xff]
    %v361 = vld [vmem:[#allocation6 + $0xb0] sm:$0xff]
    %v362 = vld [vmem:[#allocation6 + $0xb8] sm:$0xff]
    %v363 = vld [vmem:[#allocation6 + $0xc0] sm:$0xff]
    %v364 = vld [vmem:[#allocation6 + $0xc8] sm:$0xff]
    %v365 = vld [vmem:[#allocation6 + $0xd0] sm:$0xff]
    %v366 = vld [vmem:[#allocation6 + $0xd8] sm:$0xff]
    %v367 = vld [vmem:[#allocation6 + $0xe0] sm:$0xff]
    %v368 = vld [vmem:[#allocation6 + $0xe8] sm:$0xff]
    %v369 = vld [vmem:[#allocation6 + $0xf0] sm:$0xff]
    %v370 = vld [vmem:[#allocation6 + $0xf8] sm:$0xff]
    %v371 = vld [vmem:[#allocation6 + $0x100] sm:$0xff]
    %v372 = vld [vmem:[#allocation6 + $0x108] sm:$0xff]
    %v373 = vld [vmem:[#allocation6 + $0x110] sm:$0xff]
    %v374 = vld [vmem:[#allocation6 + $0x118] sm:$0xff]
    %v375 = vld [vmem:[#allocation6 + $0x120] sm:$0xff]
    %v376 = vld [vmem:[#allocation6 + $0x128] sm:$0xff]
    %v377 = vld [vmem:[#allocation6 + $0x130] sm:$0xff]
    %v378 = vld [vmem:[#allocation6 + $0x138] sm:$0xff]
    %v379 = vld [vmem:[#allocation6 + $0x140] sm:$0xff]
    %v380 = vld [vmem:[#allocation6 + $0x148] sm:$0xff]
    %v381 = vld [vmem:[#allocation6 + $0x150] sm:$0xff]
    %v382 = vld [vmem:[#allocation6 + $0x158] sm:$0xff]
    %v383 = vld [vmem:[#allocation6 + $0x160] sm:$0xff]
    %v384 = vld [vmem:[#allocation6 + $0x168] sm:$0xff]
    %v385 = vld [vmem:[#allocation6 + $0x170] sm:$0xff]
    %v386 = vld [vmem:[#allocation6 + $0x178] sm:$0xff]
    %v387 = vld [vmem:[#allocation6 + $0x180] sm:$0xff]
    %v388 = vld [vmem:[#allocation6 + $0x188] sm:$0xff]
    %v389 = vld [vmem:[#allocation6 + $0x190] sm:$0xff]
    %v390 = vld [vmem:[#allocation6 + $0x198] sm:$0xff]
    %v391 = vld [vmem:[#allocation6 + $0x1a0] sm:$0xff]
    %v392 = vld [vmem:[#allocation6 + $0x1a8] sm:$0xff]
    %v393 = vld [vmem:[#allocation6 + $0x1b0] sm:$0xff]
    %v394 = vld [vmem:[#allocation6 + $0x1b8] sm:$0xff]
    %v395 = vld [vmem:[#allocation6 + $0x1c0] sm:$0xff]
    %v396 = vld [vmem:[#allocation6 + $0x1c8] sm:$0xff]
    %v397 = vld [vmem:[#allocation6 + $0x1d0] sm:$0xff]
    %v398 = vld [vmem:[#allocation6 + $0x1d8] sm:$0xff]
    %v399 = vld [vmem:[#allocation6 + $0x1e0] sm:$0xff]
    %v400 = vld [vmem:[#allocation6 + $0x1e8] sm:$0xff]
    %v401 = vld [vmem:[#allocation6 + $0x1f0] sm:$0xff]
    %v402 = vld [vmem:[#allocation6 + $0x1f8] sm:$0xff]
    %s403 = smul.u32 0, 4
    %s404 = smul.addr %s403, 8
    %s405 = scalar_lea.vmem [#allocation2], %s404
    %v406 = vld [vmem:[%s405] sm:$0xff]
    %v407 = vld [vmem:[%s405 + $0x8] sm:$0xff]
    %v408 = vld [vmem:[%s405 + $0x10] sm:$0xff]
    %v409 = vld [vmem:[%s405 + $0x18] sm:$0xff]
    %410 = vmatpush.msra.mxu0 %v399
    %411 = vmatpush.msra.mxu0 %v395
    %412 = vmatpush.msra.mxu0 %v391
    %413 = vmatpush.msra.mxu0 %v387
    %414 = vmatpush.msra.mxu0 %v383
    %415 = vmatpush.msra.mxu0 %v379
    %416 = vmatpush.msra.mxu0 %v375
    %417 = vmatpush.msra.mxu0 %v371
    %418 = vmatpush.msra.mxu0 %v367
    %419 = vmatpush.msra.mxu0 %v363
    %420 = vmatpush.msra.mxu0 %v359
    %421 = vmatpush.msra.mxu0 %v355
    %422 = vmatpush.msra.mxu0 %v351
    %423 = vmatpush.msra.mxu0 %v347
    %424 = vmatpush.msra.mxu0 %v343
    %425 = vmatpush.msra.mxu0 %v339
    %426 = vmatmul.f32.gmra.mxu0 0.0
    %v427 = vpop.f32.mrf.mxu0
    %v428 = vadd.f32 0.0, %v427
    %429 = vdwg.mxu0
    %430 = vmatpush.msra.mxu0 %v400
    %431 = vmatpush.msra.mxu0 %v396
    %432 = vmatpush.msra.mxu0 %v392
    %433 = vmatpush.msra.mxu0 %v388
    %434 = vmatpush.msra.mxu0 %v384
    %435 = vmatpush.msra.mxu0 %v380
    %436 = vmatpush.msra.mxu0 %v376
    %437 = vmatpush.msra.mxu0 %v372
    %438 = vmatpush.msra.mxu0 %v368
    %439 = vmatpush.msra.mxu0 %v364
    %440 = vmatpush.msra.mxu0 %v360
    %441 = vmatpush.msra.mxu0 %v356
    %442 = vmatpush.msra.mxu0 %v352
    %443 = vmatpush.msra.mxu0 %v348
    %444 = vmatpush.msra.mxu0 %v344
    %445 = vmatpush.msra.mxu0 %v340
    %446 = vmatmul.f32.gmra.mxu0 0.0
    %v447 = vpop.f32.mrf.mxu0
    %v448 = vadd.f32 0.0, %v447
    %449 = vdwg.mxu0
    %450 = vmatpush.msra.mxu0 %v401
    %451 = vmatpush.msra.mxu0 %v397
    %452 = vmatpush.msra.mxu0 %v393
    %453 = vmatpush.msra.mxu0 %v389
    %454 = vmatpush.msra.mxu0 %v385
    %455 = vmatpush.msra.mxu0 %v381
    %456 = vmatpush.msra.mxu0 %v377
    %457 = vmatpush.msra.mxu0 %v373
    %458 = vmatpush.msra.mxu0 %v369
    %459 = vmatpush.msra.mxu0 %v365
    %460 = vmatpush.msra.mxu0 %v361
    %461 = vmatpush.msra.mxu0 %v357
    %462 = vmatpush.msra.mxu0 %v353
    %463 = vmatpush.msra.mxu0 %v349
    %464 = vmatpush.msra.mxu0 %v345
    %465 = vmatpush.msra.mxu0 %v341
    %466 = vmatmul.f32.gmra.mxu0 0.0
    %v467 = vpop.f32.mrf.mxu0
    %v468 = vadd.f32 0.0, %v467
    %469 = vdwg.mxu0
    %470 = vmatpush.msra.mxu0 %v402
    %471 = vmatpush.msra.mxu0 %v398
    %472 = vmatpush.msra.mxu0 %v394
    %473 = vmatpush.msra.mxu0 %v390
    %474 = vmatpush.msra.mxu0 %v386
    %475 = vmatpush.msra.mxu0 %v382
    %476 = vmatpush.msra.mxu0 %v378
    %477 = vmatpush.msra.mxu0 %v374
    %478 = vmatpush.msra.mxu0 %v370
    %479 = vmatpush.msra.mxu0 %v366
    %480 = vmatpush.msra.mxu0 %v362
    %481 = vmatpush.msra.mxu0 %v358
    %482 = vmatpush.msra.mxu0 %v354
    %483 = vmatpush.msra.mxu0 %v350
    %484 = vmatpush.msra.mxu0 %v346
    %485 = vmatpush.msra.mxu0 %v342
    %486 = vmatmul.f32.gmra.mxu0 0.0
    %v487 = vpop.f32.mrf.mxu0
    %v488 = vadd.f32 0.0, %v487
    %489 = vdwg.mxu0
    %v490 = vadd.f32 %v406, %v428
    %v491 = vadd.f32 %v407, %v448
    %v492 = vadd.f32 %v408, %v468
    %v493 = vadd.f32 %v409, %v488
    %v494 = vxor.u32 %v490, 2147483648
    %v495 = vmul.f32 %v494, 1.442695
    %v496 = vpow.pop %v495
    %v497 = vadd.f32 %v496, 1.0
    %v498 = vrcp.pop %v497
    %v499 = vmul.f32 %v497, %v498
    %v500 = vsub.f32 1.0, %v499
    %v501 = vmul.f32 %v498, %v500
    %v502 = vadd.f32 %v498, %v501
    %vm503 = vweird.f32 %v497
    %vm504 = vweird.f32 %v498
    %vm505 = vmor %vm503, %vm504
    %v506 = vsel %vm505, %v498, %v502
    %v507 = vand.u32 2147483647, %v497
    %vm508 = vcmp.eq.f32.partialorder %v507, 8.507059e+37
    %v509 = vand.u32 %v497, 2147483648
    %v510 = vor.u32 1.1754944e-38, %v509
    %v511 = vsel %vm508, %v510, %v506
    %v512 = vmul.f32 1.0, %v511
    %v513 = vxor.u32 %v491, 2147483648
    %v514 = vmul.f32 %v513, 1.442695
    %v515 = vpow.pop %v514
    %v516 = vadd.f32 %v515, 1.0
    %v517 = vrcp.pop %v516
    %v518 = vmul.f32 %v516, %v517
    %v519 = vsub.f32 1.0, %v518
    %v520 = vmul.f32 %v517, %v519
    %v521 = vadd.f32 %v517, %v520
    %vm522 = vweird.f32 %v516
    %vm523 = vweird.f32 %v517
    %vm524 = vmor %vm522, %vm523
    %v525 = vsel %vm524, %v517, %v521
    %v526 = vand.u32 2147483647, %v516
    %vm527 = vcmp.eq.f32.partialorder %v526, 8.507059e+37
    %v528 = vand.u32 %v516, 2147483648
    %v529 = vor.u32 1.1754944e-38, %v528
    %v530 = vsel %vm527, %v529, %v525
    %v531 = vmul.f32 1.0, %v530
    %v532 = vtanh.pop %v492
    %v533 = vxor.u32 %v493, 2147483648
    %v534 = vmul.f32 %v533, 1.442695
    %v535 = vpow.pop %v534
    %v536 = vadd.f32 %v535, 1.0
    %v537 = vrcp.pop %v536
    %v538 = vmul.f32 %v536, %v537
    %v539 = vsub.f32 1.0, %v538
    %v540 = vmul.f32 %v537, %v539
    %v541 = vadd.f32 %v537, %v540
    %vm542 = vweird.f32 %v536
    %vm543 = vweird.f32 %v537
    %vm544 = vmor %vm542, %vm543
    %v545 = vsel %vm544, %v537, %v541
    %v546 = vand.u32 2147483647, %v536
    %vm547 = vcmp.eq.f32.partialorder %v546, 8.507059e+37
    %v548 = vand.u32 %v536, 2147483648
    %v549 = vor.u32 1.1754944e-38, %v548
    %v550 = vsel %vm547, %v549, %v545
    %v551 = vmul.f32 1.0, %v550
    %v552 = vmul.f32 %v531, 0.0
    %v553 = vmul.f32 %v512, %v532
    %v554 = vadd.f32 %v552, %v553
    %v555 = vtanh.pop %v554
    %v556 = vmul.f32 %v551, %v555
    %s557 = smul.u32 1, 4
    %s558 = smul.addr %s557, 8
    %s559 = scalar_lea.vmem [#allocation2], %s558
    %v560 = vld [vmem:[%s559] sm:$0xff]
    %v561 = vld [vmem:[%s559 + $0x8] sm:$0xff]
    %v562 = vld [vmem:[%s559 + $0x10] sm:$0xff]
    %v563 = vld [vmem:[%s559 + $0x18] sm:$0xff]
    %564 = vmatpush.msra.mxu0 %v399
    %565 = vmatpush.msra.mxu0 %v395
    %566 = vmatpush.msra.mxu0 %v391
    %567 = vmatpush.msra.mxu0 %v387
    %568 = vmatpush.msra.mxu0 %v383
    %569 = vmatpush.msra.mxu0 %v379
    %570 = vmatpush.msra.mxu0 %v375
    %571 = vmatpush.msra.mxu0 %v371
    %572 = vmatpush.msra.mxu0 %v367
    %573 = vmatpush.msra.mxu0 %v363
    %574 = vmatpush.msra.mxu0 %v359
    %575 = vmatpush.msra.mxu0 %v355
    %576 = vmatpush.msra.mxu0 %v351
    %577 = vmatpush.msra.mxu0 %v347
    %578 = vmatpush.msra.mxu0 %v343
    %579 = vmatpush.msra.mxu0 %v339
    %580 = vmatmul.f32.gmra.mxu0 %v556
    %v581 = vpop.f32.mrf.mxu0
    %v582 = vadd.f32 0.0, %v581
    %583 = vdwg.mxu0
    %584 = vmatpush.msra.mxu0 %v400
    %585 = vmatpush.msra.mxu0 %v396
    %586 = vmatpush.msra.mxu0 %v392
    %587 = vmatpush.msra.mxu0 %v388
    %588 = vmatpush.msra.mxu0 %v384
    %589 = vmatpush.msra.mxu0 %v380
    %590 = vmatpush.msra.mxu0 %v376
    %591 = vmatpush.msra.mxu0 %v372
    %592 = vmatpush.msra.mxu0 %v368
    %593 = vmatpush.msra.mxu0 %v364
    %594 = vmatpush.msra.mxu0 %v360
    %595 = vmatpush.msra.mxu0 %v356
    %596 = vmatpush.msra.mxu0 %v352
    %597 = vmatpush.msra.mxu0 %v348
    %598 = vmatpush.msra.mxu0 %v344
    %599 = vmatpush.msra.mxu0 %v340
    %600 = vmatmul.f32.gmra.mxu0 %v556
    %v601 = vpop.f32.mrf.mxu0
    %v602 = vadd.f32 0.0, %v601
    %603 = vdwg.mxu0
    %604 = vmatpush.msra.mxu0 %v401
    %605 = vmatpush.msra.mxu0 %v397
    %606 = vmatpush.msra.mxu0 %v393
    %607 = vmatpush.msra.mxu0 %v389
    %608 = vmatpush.msra.mxu0 %v385
    %609 = vmatpush.msra.mxu0 %v381
    %610 = vmatpush.msra.mxu0 %v377
    %611 = vmatpush.msra.mxu0 %v373
    %612 = vmatpush.msra.mxu0 %v369
    %613 = vmatpush.msra.mxu0 %v365
    %614 = vmatpush.msra.mxu0 %v361
    %615 = vmatpush.msra.mxu0 %v357
    %616 = vmatpush.msra.mxu0 %v353
    %617 = vmatpush.msra.mxu0 %v349
    %618 = vmatpush.msra.mxu0 %v345
    %619 = vmatpush.msra.mxu0 %v341
    %620 = vmatmul.f32.gmra.mxu0 %v556
    %v621 = vpop.f32.mrf.mxu0
    %v622 = vadd.f32 0.0, %v621
    %623 = vdwg.mxu0
    %624 = vmatpush.msra.mxu0 %v402
    %625 = vmatpush.msra.mxu0 %v398
    %626 = vmatpush.msra.mxu0 %v394
    %627 = vmatpush.msra.mxu0 %v390
    %628 = vmatpush.msra.mxu0 %v386
    %629 = vmatpush.msra.mxu0 %v382
    %630 = vmatpush.msra.mxu0 %v378
    %631 = vmatpush.msra.mxu0 %v374
    %632 = vmatpush.msra.mxu0 %v370
    %633 = vmatpush.msra.mxu0 %v366
    %634 = vmatpush.msra.mxu0 %v362
    %635 = vmatpush.msra.mxu0 %v358
    %636 = vmatpush.msra.mxu0 %v354
    %637 = vmatpush.msra.mxu0 %v350
    %638 = vmatpush.msra.mxu0 %v346
    %639 = vmatpush.msra.mxu0 %v342
    %640 = vmatmul.f32.gmra.mxu0 %v556
    %v641 = vpop.f32.mrf.mxu0
    %v642 = vadd.f32 0.0, %v641
    %643 = vdwg.mxu0
    %v644 = vadd.f32 %v560, %v582
    %v645 = vadd.f32 %v561, %v602
    %v646 = vadd.f32 %v562, %v622
    %v647 = vadd.f32 %v563, %v642
    %v648 = vxor.u32 %v644, 2147483648
    %v649 = vmul.f32 %v648, 1.442695
    %v650 = vpow.pop %v649
    %v651 = vadd.f32 %v650, 1.0
    %v652 = vrcp.pop %v651
    %v653 = vmul.f32 %v651, %v652
    %v654 = vsub.f32 1.0, %v653
    %v655 = vmul.f32 %v652, %v654
    %v656 = vadd.f32 %v652, %v655
    %vm657 = vweird.f32 %v651
    %vm658 = vweird.f32 %v652
    %vm659 = vmor %vm657, %vm658
    %v660 = vsel %vm659, %v652, %v656
    %v661 = vand.u32 2147483647, %v651
    %vm662 = vcmp.eq.f32.partialorder %v661, 8.507059e+37
    %v663 = vand.u32 %v651, 2147483648
    %v664 = vor.u32 1.1754944e-38, %v663
    %v665 = vsel %vm662, %v664, %v660
    %v666 = vmul.f32 1.0, %v665
    %v667 = vxor.u32 %v645, 2147483648
    %v668 = vmul.f32 %v667, 1.442695
    %v669 = vpow.pop %v668
    %v670 = vadd.f32 %v669, 1.0
    %v671 = vrcp.pop %v670
    %v672 = vmul.f32 %v670, %v671
    %v673 = vsub.f32 1.0, %v672
    %v674 = vmul.f32 %v671, %v673
    %v675 = vadd.f32 %v671, %v674
    %vm676 = vweird.f32 %v670
    %vm677 = vweird.f32 %v671
    %vm678 = vmor %vm676, %vm677
    %v679 = vsel %vm678, %v671, %v675
    %v680 = vand.u32 2147483647, %v670
    %vm681 = vcmp.eq.f32.partialorder %v680, 8.507059e+37
    %v682 = vand.u32 %v670, 2147483648
    %v683 = vor.u32 1.1754944e-38, %v682
    %v684 = vsel %vm681, %v683, %v679
    %v685 = vmul.f32 1.0, %v684
    %v686 = vtanh.pop %v646
    %v687 = vxor.u32 %v647, 2147483648
    %v688 = vmul.f32 %v687, 1.442695
    %v689 = vpow.pop %v688
    %v690 = vadd.f32 %v689, 1.0
    %v691 = vrcp.pop %v690
    %v692 = vmul.f32 %v690, %v691
    %v693 = vsub.f32 1.0, %v692
    %v694 = vmul.f32 %v691, %v693
    %v695 = vadd.f32 %v691, %v694
    %vm696 = vweird.f32 %v690
    %vm697 = vweird.f32 %v691
    %vm698 = vmor %vm696, %vm697
    %v699 = vsel %vm698, %v691, %v695
    %v700 = vand.u32 2147483647, %v690
    %vm701 = vcmp.eq.f32.partialorder %v700, 8.507059e+37
    %v702 = vand.u32 %v690, 2147483648
    %v703 = vor.u32 1.1754944e-38, %v702
    %v704 = vsel %vm701, %v703, %v699
    %v705 = vmul.f32 1.0, %v704
    %v706 = vmul.f32 %v685, %v554
    %v707 = vmul.f32 %v666, %v686
    %v708 = vadd.f32 %v706, %v707
    %v709 = vtanh.pop %v708
    %v710 = vmul.f32 %v705, %v709
    %s711 = smul.u32 2, 4
    %s712 = smul.addr %s711, 8
    %s713 = scalar_lea.vmem [#allocation2], %s712
    %v714 = vld [vmem:[%s713] sm:$0xff]
    %v715 = vld [vmem:[%s713 + $0x8] sm:$0xff]
    %v716 = vld [vmem:[%s713 + $0x10] sm:$0xff]
    %v717 = vld [vmem:[%s713 + $0x18] sm:$0xff]
    %718 = vmatpush.msra.mxu0 %v399
    %719 = vmatpush.msra.mxu0 %v395
    %720 = vmatpush.msra.mxu0 %v391
    %721 = vmatpush.msra.mxu0 %v387
    %722 = vmatpush.msra.mxu0 %v383
    %723 = vmatpush.msra.mxu0 %v379
    %724 = vmatpush.msra.mxu0 %v375
    %725 = vmatpush.msra.mxu0 %v371
    %726 = vmatpush.msra.mxu0 %v367
    %727 = vmatpush.msra.mxu0 %v363
    %728 = vmatpush.msra.mxu0 %v359
    %729 = vmatpush.msra.mxu0 %v355
    %730 = vmatpush.msra.mxu0 %v351
    %731 = vmatpush.msra.mxu0 %v347
    %732 = vmatpush.msra.mxu0 %v343
    %733 = vmatpush.msra.mxu0 %v339
    %734 = vmatmul.f32.gmra.mxu0 %v710
    %v735 = vpop.f32.mrf.mxu0
    %v736 = vadd.f32 0.0, %v735
    %737 = vdwg.mxu0
    %738 = vmatpush.msra.mxu0 %v400
    %739 = vmatpush.msra.mxu0 %v396
    %740 = vmatpush.msra.mxu0 %v392
    %741 = vmatpush.msra.mxu0 %v388
    %742 = vmatpush.msra.mxu0 %v384
    %743 = vmatpush.msra.mxu0 %v380
    %744 = vmatpush.msra.mxu0 %v376
    %745 = vmatpush.msra.mxu0 %v372
    %746 = vmatpush.msra.mxu0 %v368
    %747 = vmatpush.msra.mxu0 %v364
    %748 = vmatpush.msra.mxu0 %v360
    %749 = vmatpush.msra.mxu0 %v356
    %750 = vmatpush.msra.mxu0 %v352
    %751 = vmatpush.msra.mxu0 %v348
    %752 = vmatpush.msra.mxu0 %v344
    %753 = vmatpush.msra.mxu0 %v340
    %754 = vmatmul.f32.gmra.mxu0 %v710
    %v755 = vpop.f32.mrf.mxu0
    %v756 = vadd.f32 0.0, %v755
    %757 = vdwg.mxu0
    %758 = vmatpush.msra.mxu0 %v401
    %759 = vmatpush.msra.mxu0 %v397
    %760 = vmatpush.msra.mxu0 %v393
    %761 = vmatpush.msra.mxu0 %v389
    %762 = vmatpush.msra.mxu0 %v385
    %763 = vmatpush.msra.mxu0 %v381
    %764 = vmatpush.msra.mxu0 %v377
    %765 = vmatpush.msra.mxu0 %v373
    %766 = vmatpush.msra.mxu0 %v369
    %767 = vmatpush.msra.mxu0 %v365
    %768 = vmatpush.msra.mxu0 %v361
    %769 = vmatpush.msra.mxu0 %v357
    %770 = vmatpush.msra.mxu0 %v353
    %771 = vmatpush.msra.mxu0 %v349
    %772 = vmatpush.msra.mxu0 %v345
    %773 = vmatpush.msra.mxu0 %v341
    %774 = vmatmul.f32.gmra.mxu0 %v710
    %v775 = vpop.f32.mrf.mxu0
    %v776 = vadd.f32 0.0, %v775
    %777 = vdwg.mxu0
    %778 = vmatpush.msra.mxu0 %v402
    %779 = vmatpush.msra.mxu0 %v398
    %780 = vmatpush.msra.mxu0 %v394
    %781 = vmatpush.msra.mxu0 %v390
    %782 = vmatpush.msra.mxu0 %v386
    %783 = vmatpush.msra.mxu0 %v382
    %784 = vmatpush.msra.mxu0 %v378
    %785 = vmatpush.msra.mxu0 %v374
    %786 = vmatpush.msra.mxu0 %v370
    %787 = vmatpush.msra.mxu0 %v366
    %788 = vmatpush.msra.mxu0 %v362
    %789 = vmatpush.msra.mxu0 %v358
    %790 = vmatpush.msra.mxu0 %v354
    %791 = vmatpush.msra.mxu0 %v350
    %792 = vmatpush.msra.mxu0 %v346
    %793 = vmatpush.msra.mxu0 %v342
    %794 = vmatmul.f32.gmra.mxu0 %v710
    %v795 = vpop.f32.mrf.mxu0
    %v796 = vadd.f32 0.0, %v795
    %797 = vdwg.mxu0
    %v798 = vadd.f32 %v714, %v736
    %v799 = vadd.f32 %v715, %v756
    %v800 = vadd.f32 %v716, %v776
    %v801 = vadd.f32 %v717, %v796
    %v802 = vxor.u32 %v798, 2147483648
    %v803 = vmul.f32 %v802, 1.442695
    %v804 = vpow.pop %v803
    %v805 = vadd.f32 %v804, 1.0
    %v806 = vrcp.pop %v805
    %v807 = vmul.f32 %v805, %v806
    %v808 = vsub.f32 1.0, %v807
    %v809 = vmul.f32 %v806, %v808
    %v810 = vadd.f32 %v806, %v809
    %vm811 = vweird.f32 %v805
    %vm812 = vweird.f32 %v806
    %vm813 = vmor %vm811, %vm812
    %v814 = vsel %vm813, %v806, %v810
    %v815 = vand.u32 2147483647, %v805
    %vm816 = vcmp.eq.f32.partialorder %v815, 8.507059e+37
    %v817 = vand.u32 %v805, 2147483648
    %v818 = vor.u32 1.1754944e-38, %v817
    %v819 = vsel %vm816, %v818, %v814
    %v820 = vmul.f32 1.0, %v819
    %v821 = vxor.u32 %v799, 2147483648
    %v822 = vmul.f32 %v821, 1.442695
    %v823 = vpow.pop %v822
    %v824 = vadd.f32 %v823, 1.0
    %v825 = vrcp.pop %v824
    %v826 = vmul.f32 %v824, %v825
    %v827 = vsub.f32 1.0, %v826
    %v828 = vmul.f32 %v825, %v827
    %v829 = vadd.f32 %v825, %v828
    %vm830 = vweird.f32 %v824
    %vm831 = vweird.f32 %v825
    %vm832 = vmor %vm830, %vm831
    %v833 = vsel %vm832, %v825, %v829
    %v834 = vand.u32 2147483647, %v824
    %vm835 = vcmp.eq.f32.partialorder %v834, 8.507059e+37
    %v836 = vand.u32 %v824, 2147483648
    %v837 = vor.u32 1.1754944e-38, %v836
    %v838 = vsel %vm835, %v837, %v833
    %v839 = vmul.f32 1.0, %v838
    %v840 = vtanh.pop %v800
    %v841 = vxor.u32 %v801, 2147483648
    %v842 = vmul.f32 %v841, 1.442695
    %v843 = vpow.pop %v842
    %v844 = vadd.f32 %v843, 1.0
    %v845 = vrcp.pop %v844
    %v846 = vmul.f32 %v844, %v845
    %v847 = vsub.f32 1.0, %v846
    %v848 = vmul.f32 %v845, %v847
    %v849 = vadd.f32 %v845, %v848
    %vm850 = vweird.f32 %v844
    %vm851 = vweird.f32 %v845
    %vm852 = vmor %vm850, %vm851
    %v853 = vsel %vm852, %v845, %v849
    %v854 = vand.u32 2147483647, %v844
    %vm855 = vcmp.eq.f32.partialorder %v854, 8.507059e+37
    %v856 = vand.u32 %v844, 2147483648
    %v857 = vor.u32 1.1754944e-38, %v856
    %v858 = vsel %vm855, %v857, %v853
    %v859 = vmul.f32 1.0, %v858
    %v860 = vmul.f32 %v839, %v708
    %v861 = vmul.f32 %v820, %v840
    %v862 = vadd.f32 %v860, %v861
    %v863 = vtanh.pop %v862
    %v864 = vmul.f32 %v859, %v863
    %s865 = smul.u32 3, 4
    %s866 = smul.addr %s865, 8
    %s867 = scalar_lea.vmem [#allocation2], %s866
    %v868 = vld [vmem:[%s867] sm:$0xff]
    %v869 = vld [vmem:[%s867 + $0x8] sm:$0xff]
    %v870 = vld [vmem:[%s867 + $0x10] sm:$0xff]
    %v871 = vld [vmem:[%s867 + $0x18] sm:$0xff]
    %872 = vmatpush.msra.mxu0 %v399
    %873 = vmatpush.msra.mxu0 %v395
    %874 = vmatpush.msra.mxu0 %v391
    %875 = vmatpush.msra.mxu0 %v387
    %876 = vmatpush.msra.mxu0 %v383
    %877 = vmatpush.msra.mxu0 %v379
    %878 = vmatpush.msra.mxu0 %v375
    %879 = vmatpush.msra.mxu0 %v371
    %880 = vmatpush.msra.mxu0 %v367
    %881 = vmatpush.msra.mxu0 %v363
    %882 = vmatpush.msra.mxu0 %v359
    %883 = vmatpush.msra.mxu0 %v355
    %884 = vmatpush.msra.mxu0 %v351
    %885 = vmatpush.msra.mxu0 %v347
    %886 = vmatpush.msra.mxu0 %v343
    %887 = vmatpush.msra.mxu0 %v339
    %888 = vmatmul.f32.gmra.mxu0 %v864
    %v889 = vpop.f32.mrf.mxu0
    %v890 = vadd.f32 0.0, %v889
    %891 = vdwg.mxu0
    %892 = vmatpush.msra.mxu0 %v400
    %893 = vmatpush.msra.mxu0 %v396
    %894 = vmatpush.msra.mxu0 %v392
    %895 = vmatpush.msra.mxu0 %v388
    %896 = vmatpush.msra.mxu0 %v384
    %897 = vmatpush.msra.mxu0 %v380
    %898 = vmatpush.msra.mxu0 %v376
    %899 = vmatpush.msra.mxu0 %v372
    %900 = vmatpush.msra.mxu0 %v368
    %901 = vmatpush.msra.mxu0 %v364
    %902 = vmatpush.msra.mxu0 %v360
    %903 = vmatpush.msra.mxu0 %v356
    %904 = vmatpush.msra.mxu0 %v352
    %905 = vmatpush.msra.mxu0 %v348
    %906 = vmatpush.msra.mxu0 %v344
    %907 = vmatpush.msra.mxu0 %v340
    %908 = vmatmul.f32.gmra.mxu0 %v864
    %v909 = vpop.f32.mrf.mxu0
    %v910 = vadd.f32 0.0, %v909
    %911 = vdwg.mxu0
    %912 = vmatpush.msra.mxu0 %v401
    %913 = vmatpush.msra.mxu0 %v397
    %914 = vmatpush.msra.mxu0 %v393
    %915 = vmatpush.msra.mxu0 %v389
    %916 = vmatpush.msra.mxu0 %v385
    %917 = vmatpush.msra.mxu0 %v381
    %918 = vmatpush.msra.mxu0 %v377
    %919 = vmatpush.msra.mxu0 %v373
    %920 = vmatpush.msra.mxu0 %v369
    %921 = vmatpush.msra.mxu0 %v365
    %922 = vmatpush.msra.mxu0 %v361
    %923 = vmatpush.msra.mxu0 %v357
    %924 = vmatpush.msra.mxu0 %v353
    %925 = vmatpush.msra.mxu0 %v349
    %926 = vmatpush.msra.mxu0 %v345
    %927 = vmatpush.msra.mxu0 %v341
    %928 = vmatmul.f32.gmra.mxu0 %v864
    %v929 = vpop.f32.mrf.mxu0
    %v930 = vadd.f32 0.0, %v929
    %931 = vdwg.mxu0
    %932 = vmatpush.msra.mxu0 %v402
    %933 = vmatpush.msra.mxu0 %v398
    %934 = vmatpush.msra.mxu0 %v394
    %935 = vmatpush.msra.mxu0 %v390
    %936 = vmatpush.msra.mxu0 %v386
    %937 = vmatpush.msra.mxu0 %v382
    %938 = vmatpush.msra.mxu0 %v378
    %939 = vmatpush.msra.mxu0 %v374
    %940 = vmatpush.msra.mxu0 %v370
    %941 = vmatpush.msra.mxu0 %v366
    %942 = vmatpush.msra.mxu0 %v362
    %943 = vmatpush.msra.mxu0 %v358
    %944 = vmatpush.msra.mxu0 %v354
    %945 = vmatpush.msra.mxu0 %v350
    %946 = vmatpush.msra.mxu0 %v346
    %947 = vmatpush.msra.mxu0 %v342
    %948 = vmatmul.f32.gmra.mxu0 %v864
    %v949 = vpop.f32.mrf.mxu0
    %v950 = vadd.f32 0.0, %v949
    %951 = vdwg.mxu0
    %v952 = vadd.f32 %v868, %v890
    %v953 = vadd.f32 %v869, %v910
    %v954 = vadd.f32 %v870, %v930
    %v955 = vadd.f32 %v871, %v950
    %v956 = vxor.u32 %v952, 2147483648
    %v957 = vmul.f32 %v956, 1.442695
    %v958 = vpow.pop %v957
    %v959 = vadd.f32 %v958, 1.0
    %v960 = vrcp.pop %v959
    %v961 = vmul.f32 %v959, %v960
    %v962 = vsub.f32 1.0, %v961
    %v963 = vmul.f32 %v960, %v962
    %v964 = vadd.f32 %v960, %v963
    %vm965 = vweird.f32 %v959
    %vm966 = vweird.f32 %v960
    %vm967 = vmor %vm965, %vm966
    %v968 = vsel %vm967, %v960, %v964
    %v969 = vand.u32 2147483647, %v959
    %vm970 = vcmp.eq.f32.partialorder %v969, 8.507059e+37
    %v971 = vand.u32 %v959, 2147483648
    %v972 = vor.u32 1.1754944e-38, %v971
    %v973 = vsel %vm970, %v972, %v968
    %v974 = vmul.f32 1.0, %v973
    %v975 = vxor.u32 %v953, 2147483648
    %v976 = vmul.f32 %v975, 1.442695
    %v977 = vpow.pop %v976
    %v978 = vadd.f32 %v977, 1.0
    %v979 = vrcp.pop %v978
    %v980 = vmul.f32 %v978, %v979
    %v981 = vsub.f32 1.0, %v980
    %v982 = vmul.f32 %v979, %v981
    %v983 = vadd.f32 %v979, %v982
    %vm984 = vweird.f32 %v978
    %vm985 = vweird.f32 %v979
    %vm986 = vmor %vm984, %vm985
    %v987 = vsel %vm986, %v979, %v983
    %v988 = vand.u32 2147483647, %v978
    %vm989 = vcmp.eq.f32.partialorder %v988, 8.507059e+37
    %v990 = vand.u32 %v978, 2147483648
    %v991 = vor.u32 1.1754944e-38, %v990
    %v992 = vsel %vm989, %v991, %v987
    %v993 = vmul.f32 1.0, %v992
    %v994 = vtanh.pop %v954
    %v995 = vxor.u32 %v955, 2147483648
    %v996 = vmul.f32 %v995, 1.442695
    %v997 = vpow.pop %v996
    %v998 = vadd.f32 %v997, 1.0
    %v999 = vrcp.pop %v998
    %v1000 = vmul.f32 %v998, %v999
    %v1001 = vsub.f32 1.0, %v1000
    %v1002 = vmul.f32 %v999, %v1001
    %v1003 = vadd.f32 %v999, %v1002
    %vm1004 = vweird.f32 %v998
    %vm1005 = vweird.f32 %v999
    %vm1006 = vmor %vm1004, %vm1005
    %v1007 = vsel %vm1006, %v999, %v1003
    %v1008 = vand.u32 2147483647, %v998
    %vm1009 = vcmp.eq.f32.partialorder %v1008, 8.507059e+37
    %v1010 = vand.u32 %v998, 2147483648
    %v1011 = vor.u32 1.1754944e-38, %v1010
    %v1012 = vsel %vm1009, %v1011, %v1007
    %v1013 = vmul.f32 1.0, %v1012
    %v1014 = vmul.f32 %v993, %v862
    %v1015 = vmul.f32 %v974, %v994
    %v1016 = vadd.f32 %v1014, %v1015
    %v1017 = vtanh.pop %v1016
    %v1018 = vmul.f32 %v1013, %v1017
    %s1019 = smul.u32 4, 4
    %s1020 = smul.addr %s1019, 8
    %s1021 = scalar_lea.vmem [#allocation2], %s1020
    %v1022 = vld [vmem:[%s1021] sm:$0xff]
    %v1023 = vld [vmem:[%s1021 + $0x8] sm:$0xff]
    %v1024 = vld [vmem:[%s1021 + $0x10] sm:$0xff]
    %v1025 = vld [vmem:[%s1021 + $0x18] sm:$0xff]
    %1026 = vmatpush.msra.mxu0 %v399
    %1027 = vmatpush.msra.mxu0 %v395
    %1028 = vmatpush.msra.mxu0 %v391
    %1029 = vmatpush.msra.mxu0 %v387
    %1030 = vmatpush.msra.mxu0 %v383
    %1031 = vmatpush.msra.mxu0 %v379
    %1032 = vmatpush.msra.mxu0 %v375
    %1033 = vmatpush.msra.mxu0 %v371
    %1034 = vmatpush.msra.mxu0 %v367
    %1035 = vmatpush.msra.mxu0 %v363
    %1036 = vmatpush.msra.mxu0 %v359
    %1037 = vmatpush.msra.mxu0 %v355
    %1038 = vmatpush.msra.mxu0 %v351
    %1039 = vmatpush.msra.mxu0 %v347
    %1040 = vmatpush.msra.mxu0 %v343
    %1041 = vmatpush.msra.mxu0 %v339
    %1042 = vmatmul.f32.gmra.mxu0 %v1018
    %v1043 = vpop.f32.mrf.mxu0
    %v1044 = vadd.f32 0.0, %v1043
    %1045 = vdwg.mxu0
    %1046 = vmatpush.msra.mxu0 %v400
    %1047 = vmatpush.msra.mxu0 %v396
    %1048 = vmatpush.msra.mxu0 %v392
    %1049 = vmatpush.msra.mxu0 %v388
    %1050 = vmatpush.msra.mxu0 %v384
    %1051 = vmatpush.msra.mxu0 %v380
    %1052 = vmatpush.msra.mxu0 %v376
    %1053 = vmatpush.msra.mxu0 %v372
    %1054 = vmatpush.msra.mxu0 %v368
    %1055 = vmatpush.msra.mxu0 %v364
    %1056 = vmatpush.msra.mxu0 %v360
    %1057 = vmatpush.msra.mxu0 %v356
    %1058 = vmatpush.msra.mxu0 %v352
    %1059 = vmatpush.msra.mxu0 %v348
    %1060 = vmatpush.msra.mxu0 %v344
    %1061 = vmatpush.msra.mxu0 %v340
    %1062 = vmatmul.f32.gmra.mxu0 %v1018
    %v1063 = vpop.f32.mrf.mxu0
    %v1064 = vadd.f32 0.0, %v1063
    %1065 = vdwg.mxu0
    %1066 = vmatpush.msra.mxu0 %v401
    %1067 = vmatpush.msra.mxu0 %v397
    %1068 = vmatpush.msra.mxu0 %v393
    %1069 = vmatpush.msra.mxu0 %v389
    %1070 = vmatpush.msra.mxu0 %v385
    %1071 = vmatpush.msra.mxu0 %v381
    %1072 = vmatpush.msra.mxu0 %v377
    %1073 = vmatpush.msra.mxu0 %v373
    %1074 = vmatpush.msra.mxu0 %v369
    %1075 = vmatpush.msra.mxu0 %v365
    %1076 = vmatpush.msra.mxu0 %v361
    %1077 = vmatpush.msra.mxu0 %v357
    %1078 = vmatpush.msra.mxu0 %v353
    %1079 = vmatpush.msra.mxu0 %v349
    %1080 = vmatpush.msra.mxu0 %v345
    %1081 = vmatpush.msra.mxu0 %v341
    %1082 = vmatmul.f32.gmra.mxu0 %v1018
    %v1083 = vpop.f32.mrf.mxu0
    %v1084 = vadd.f32 0.0, %v1083
    %1085 = vdwg.mxu0
    %1086 = vmatpush.msra.mxu0 %v402
    %1087 = vmatpush.msra.mxu0 %v398
    %1088 = vmatpush.msra.mxu0 %v394
    %1089 = vmatpush.msra.mxu0 %v390
    %1090 = vmatpush.msra.mxu0 %v386
    %1091 = vmatpush.msra.mxu0 %v382
    %1092 = vmatpush.msra.mxu0 %v378
    %1093 = vmatpush.msra.mxu0 %v374
    %1094 = vmatpush.msra.mxu0 %v370
    %1095 = vmatpush.msra.mxu0 %v366
    %1096 = vmatpush.msra.mxu0 %v362
    %1097 = vmatpush.msra.mxu0 %v358
    %1098 = vmatpush.msra.mxu0 %v354
    %1099 = vmatpush.msra.mxu0 %v350
    %1100 = vmatpush.msra.mxu0 %v346
    %1101 = vmatpush.msra.mxu0 %v342
    %1102 = vmatmul.f32.gmra.mxu0 %v1018
    %v1103 = vpop.f32.mrf.mxu0
    %v1104 = vadd.f32 0.0, %v1103
    %1105 = vdwg.mxu0
    %v1106 = vadd.f32 %v1022, %v1044
    %v1107 = vadd.f32 %v1023, %v1064
    %v1108 = vadd.f32 %v1024, %v1084
    %v1109 = vadd.f32 %v1025, %v1104
    %v1110 = vxor.u32 %v1106, 2147483648
    %v1111 = vmul.f32 %v1110, 1.442695
    %v1112 = vpow.pop %v1111
    %v1113 = vadd.f32 %v1112, 1.0
    %v1114 = vrcp.pop %v1113
    %v1115 = vmul.f32 %v1113, %v1114
    %v1116 = vsub.f32 1.0, %v1115
    %v1117 = vmul.f32 %v1114, %v1116
    %v1118 = vadd.f32 %v1114, %v1117
    %vm1119 = vweird.f32 %v1113
    %vm1120 = vweird.f32 %v1114
    %vm1121 = vmor %vm1119, %vm1120
    %v1122 = vsel %vm1121, %v1114, %v1118
    %v1123 = vand.u32 2147483647, %v1113
    %vm1124 = vcmp.eq.f32.partialorder %v1123, 8.507059e+37
    %v1125 = vand.u32 %v1113, 2147483648
    %v1126 = vor.u32 1.1754944e-38, %v1125
    %v1127 = vsel %vm1124, %v1126, %v1122
    %v1128 = vmul.f32 1.0, %v1127
    %v1129 = vxor.u32 %v1107, 2147483648
    %v1130 = vmul.f32 %v1129, 1.442695
    %v1131 = vpow.pop %v1130
    %v1132 = vadd.f32 %v1131, 1.0
    %v1133 = vrcp.pop %v1132
    %v1134 = vmul.f32 %v1132, %v1133
    %v1135 = vsub.f32 1.0, %v1134
    %v1136 = vmul.f32 %v1133, %v1135
    %v1137 = vadd.f32 %v1133, %v1136
    %vm1138 = vweird.f32 %v1132
    %vm1139 = vweird.f32 %v1133
    %vm1140 = vmor %vm1138, %vm1139
    %v1141 = vsel %vm1140, %v1133, %v1137
    %v1142 = vand.u32 2147483647, %v1132
    %vm1143 = vcmp.eq.f32.partialorder %v1142, 8.507059e+37
    %v1144 = vand.u32 %v1132, 2147483648
    %v1145 = vor.u32 1.1754944e-38, %v1144
    %v1146 = vsel %vm1143, %v1145, %v1141
    %v1147 = vmul.f32 1.0, %v1146
    %v1148 = vtanh.pop %v1108
    %v1149 = vxor.u32 %v1109, 2147483648
    %v1150 = vmul.f32 %v1149, 1.442695
    %v1151 = vpow.pop %v1150
    %v1152 = vadd.f32 %v1151, 1.0
    %v1153 = vrcp.pop %v1152
    %v1154 = vmul.f32 %v1152, %v1153
    %v1155 = vsub.f32 1.0, %v1154
    %v1156 = vmul.f32 %v1153, %v1155
    %v1157 = vadd.f32 %v1153, %v1156
    %vm1158 = vweird.f32 %v1152
    %vm1159 = vweird.f32 %v1153
    %vm1160 = vmor %vm1158, %vm1159
    %v1161 = vsel %vm1160, %v1153, %v1157
    %v1162 = vand.u32 2147483647, %v1152
    %vm1163 = vcmp.eq.f32.partialorder %v1162, 8.507059e+37
    %v1164 = vand.u32 %v1152, 2147483648
    %v1165 = vor.u32 1.1754944e-38, %v1164
    %v1166 = vsel %vm1163, %v1165, %v1161
    %v1167 = vmul.f32 1.0, %v1166
    %v1168 = vmul.f32 %v1147, %v1016
    %v1169 = vmul.f32 %v1128, %v1148
    %v1170 = vadd.f32 %v1168, %v1169
    %v1171 = vtanh.pop %v1170
    %v1172 = vmul.f32 %v1167, %v1171
    %s1173 = smul.u32 5, 4
    %s1174 = smul.addr %s1173, 8
    %s1175 = scalar_lea.vmem [#allocation2], %s1174
    %v1176 = vld [vmem:[%s1175] sm:$0xff]
    %v1177 = vld [vmem:[%s1175 + $0x8] sm:$0xff]
    %v1178 = vld [vmem:[%s1175 + $0x10] sm:$0xff]
    %v1179 = vld [vmem:[%s1175 + $0x18] sm:$0xff]
    %1180 = vmatpush.msra.mxu0 %v399
    %1181 = vmatpush.msra.mxu0 %v395
    %1182 = vmatpush.msra.mxu0 %v391
    %1183 = vmatpush.msra.mxu0 %v387
    %1184 = vmatpush.msra.mxu0 %v383
    %1185 = vmatpush.msra.mxu0 %v379
    %1186 = vmatpush.msra.mxu0 %v375
    %1187 = vmatpush.msra.mxu0 %v371
    %1188 = vmatpush.msra.mxu0 %v367
    %1189 = vmatpush.msra.mxu0 %v363
    %1190 = vmatpush.msra.mxu0 %v359
    %1191 = vmatpush.msra.mxu0 %v355
    %1192 = vmatpush.msra.mxu0 %v351
    %1193 = vmatpush.msra.mxu0 %v347
    %1194 = vmatpush.msra.mxu0 %v343
    %1195 = vmatpush.msra.mxu0 %v339
    %1196 = vmatmul.f32.gmra.mxu0 %v1172
    %v1197 = vpop.f32.mrf.mxu0
    %v1198 = vadd.f32 0.0, %v1197
    %1199 = vdwg.mxu0
    %1200 = vmatpush.msra.mxu0 %v400
    %1201 = vmatpush.msra.mxu0 %v396
    %1202 = vmatpush.msra.mxu0 %v392
    %1203 = vmatpush.msra.mxu0 %v388
    %1204 = vmatpush.msra.mxu0 %v384
    %1205 = vmatpush.msra.mxu0 %v380
    %1206 = vmatpush.msra.mxu0 %v376
    %1207 = vmatpush.msra.mxu0 %v372
    %1208 = vmatpush.msra.mxu0 %v368
    %1209 = vmatpush.msra.mxu0 %v364
    %1210 = vmatpush.msra.mxu0 %v360
    %1211 = vmatpush.msra.mxu0 %v356
    %1212 = vmatpush.msra.mxu0 %v352
    %1213 = vmatpush.msra.mxu0 %v348
    %1214 = vmatpush.msra.mxu0 %v344
    %1215 = vmatpush.msra.mxu0 %v340
    %1216 = vmatmul.f32.gmra.mxu0 %v1172
    %v1217 = vpop.f32.mrf.mxu0
    %v1218 = vadd.f32 0.0, %v1217
    %1219 = vdwg.mxu0
    %1220 = vmatpush.msra.mxu0 %v401
    %1221 = vmatpush.msra.mxu0 %v397
    %1222 = vmatpush.msra.mxu0 %v393
    %1223 = vmatpush.msra.mxu0 %v389
    %1224 = vmatpush.msra.mxu0 %v385
    %1225 = vmatpush.msra.mxu0 %v381
    %1226 = vmatpush.msra.mxu0 %v377
    %1227 = vmatpush.msra.mxu0 %v373
    %1228 = vmatpush.msra.mxu0 %v369
    %1229 = vmatpush.msra.mxu0 %v365
    %1230 = vmatpush.msra.mxu0 %v361
    %1231 = vmatpush.msra.mxu0 %v357
    %1232 = vmatpush.msra.mxu0 %v353
    %1233 = vmatpush.msra.mxu0 %v349
    %1234 = vmatpush.msra.mxu0 %v345
    %1235 = vmatpush.msra.mxu0 %v341
    %1236 = vmatmul.f32.gmra.mxu0 %v1172
    %v1237 = vpop.f32.mrf.mxu0
    %v1238 = vadd.f32 0.0, %v1237
    %1239 = vdwg.mxu0
    %1240 = vmatpush.msra.mxu0 %v402
    %1241 = vmatpush.msra.mxu0 %v398
    %1242 = vmatpush.msra.mxu0 %v394
    %1243 = vmatpush.msra.mxu0 %v390
    %1244 = vmatpush.msra.mxu0 %v386
    %1245 = vmatpush.msra.mxu0 %v382
    %1246 = vmatpush.msra.mxu0 %v378
    %1247 = vmatpush.msra.mxu0 %v374
    %1248 = vmatpush.msra.mxu0 %v370
    %1249 = vmatpush.msra.mxu0 %v366
    %1250 = vmatpush.msra.mxu0 %v362
    %1251 = vmatpush.msra.mxu0 %v358
    %1252 = vmatpush.msra.mxu0 %v354
    %1253 = vmatpush.msra.mxu0 %v350
    %1254 = vmatpush.msra.mxu0 %v346
    %1255 = vmatpush.msra.mxu0 %v342
    %1256 = vmatmul.f32.gmra.mxu0 %v1172
    %v1257 = vpop.f32.mrf.mxu0
    %v1258 = vadd.f32 0.0, %v1257
    %1259 = vdwg.mxu0
    %v1260 = vadd.f32 %v1176, %v1198
    %v1261 = vadd.f32 %v1177, %v1218
    %v1262 = vadd.f32 %v1178, %v1238
    %v1263 = vadd.f32 %v1179, %v1258
    %v1264 = vxor.u32 %v1260, 2147483648
    %v1265 = vmul.f32 %v1264, 1.442695
    %v1266 = vpow.pop %v1265
    %v1267 = vadd.f32 %v1266, 1.0
    %v1268 = vrcp.pop %v1267
    %v1269 = vmul.f32 %v1267, %v1268
    %v1270 = vsub.f32 1.0, %v1269
    %v1271 = vmul.f32 %v1268, %v1270
    %v1272 = vadd.f32 %v1268, %v1271
    %vm1273 = vweird.f32 %v1267
    %vm1274 = vweird.f32 %v1268
    %vm1275 = vmor %vm1273, %vm1274
    %v1276 = vsel %vm1275, %v1268, %v1272
    %v1277 = vand.u32 2147483647, %v1267
    %vm1278 = vcmp.eq.f32.partialorder %v1277, 8.507059e+37
    %v1279 = vand.u32 %v1267, 2147483648
    %v1280 = vor.u32 1.1754944e-38, %v1279
    %v1281 = vsel %vm1278, %v1280, %v1276
    %v1282 = vmul.f32 1.0, %v1281
    %v1283 = vxor.u32 %v1261, 2147483648
    %v1284 = vmul.f32 %v1283, 1.442695
    %v1285 = vpow.pop %v1284
    %v1286 = vadd.f32 %v1285, 1.0
    %v1287 = vrcp.pop %v1286
    %v1288 = vmul.f32 %v1286, %v1287
    %v1289 = vsub.f32 1.0, %v1288
    %v1290 = vmul.f32 %v1287, %v1289
    %v1291 = vadd.f32 %v1287, %v1290
    %vm1292 = vweird.f32 %v1286
    %vm1293 = vweird.f32 %v1287
    %vm1294 = vmor %vm1292, %vm1293
    %v1295 = vsel %vm1294, %v1287, %v1291
    %v1296 = vand.u32 2147483647, %v1286
    %vm1297 = vcmp.eq.f32.partialorder %v1296, 8.507059e+37
    %v1298 = vand.u32 %v1286, 2147483648
    %v1299 = vor.u32 1.1754944e-38, %v1298
    %v1300 = vsel %vm1297, %v1299, %v1295
    %v1301 = vmul.f32 1.0, %v1300
    %v1302 = vtanh.pop %v1262
    %v1303 = vxor.u32 %v1263, 2147483648
    %v1304 = vmul.f32 %v1303, 1.442695
    %v1305 = vpow.pop %v1304
    %v1306 = vadd.f32 %v1305, 1.0
    %v1307 = vrcp.pop %v1306
    %v1308 = vmul.f32 %v1306, %v1307
    %v1309 = vsub.f32 1.0, %v1308
    %v1310 = vmul.f32 %v1307, %v1309
    %v1311 = vadd.f32 %v1307, %v1310
    %vm1312 = vweird.f32 %v1306
    %vm1313 = vweird.f32 %v1307
    %vm1314 = vmor %vm1312, %vm1313
    %v1315 = vsel %vm1314, %v1307, %v1311
    %v1316 = vand.u32 2147483647, %v1306
    %vm1317 = vcmp.eq.f32.partialorder %v1316, 8.507059e+37
    %v1318 = vand.u32 %v1306, 2147483648
    %v1319 = vor.u32 1.1754944e-38, %v1318
    %v1320 = vsel %vm1317, %v1319, %v1315
    %v1321 = vmul.f32 1.0, %v1320
    %v1322 = vmul.f32 %v1301, %v1170
    %v1323 = vmul.f32 %v1282, %v1302
    %v1324 = vadd.f32 %v1322, %v1323
    %v1325 = vtanh.pop %v1324
    %v1326 = vmul.f32 %v1321, %v1325
    %s1327 = smul.u32 6, 4
    %s1328 = smul.addr %s1327, 8
    %s1329 = scalar_lea.vmem [#allocation2], %s1328
    %v1330 = vld [vmem:[%s1329] sm:$0xff]
    %v1331 = vld [vmem:[%s1329 + $0x8] sm:$0xff]
    %v1332 = vld [vmem:[%s1329 + $0x10] sm:$0xff]
    %v1333 = vld [vmem:[%s1329 + $0x18] sm:$0xff]
    %1334 = vmatpush.msra.mxu0 %v399
    %1335 = vmatpush.msra.mxu0 %v395
    %1336 = vmatpush.msra.mxu0 %v391
    %1337 = vmatpush.msra.mxu0 %v387
    %1338 = vmatpush.msra.mxu0 %v383
    %1339 = vmatpush.msra.mxu0 %v379
    %1340 = vmatpush.msra.mxu0 %v375
    %1341 = vmatpush.msra.mxu0 %v371
    %1342 = vmatpush.msra.mxu0 %v367
    %1343 = vmatpush.msra.mxu0 %v363
    %1344 = vmatpush.msra.mxu0 %v359
    %1345 = vmatpush.msra.mxu0 %v355
    %1346 = vmatpush.msra.mxu0 %v351
    %1347 = vmatpush.msra.mxu0 %v347
    %1348 = vmatpush.msra.mxu0 %v343
    %1349 = vmatpush.msra.mxu0 %v339
    %1350 = vmatmul.f32.gmra.mxu0 %v1326
    %v1351 = vpop.f32.mrf.mxu0
    %v1352 = vadd.f32 0.0, %v1351
    %1353 = vdwg.mxu0
    %1354 = vmatpush.msra.mxu0 %v400
    %1355 = vmatpush.msra.mxu0 %v396
    %1356 = vmatpush.msra.mxu0 %v392
    %1357 = vmatpush.msra.mxu0 %v388
    %1358 = vmatpush.msra.mxu0 %v384
    %1359 = vmatpush.msra.mxu0 %v380
    %1360 = vmatpush.msra.mxu0 %v376
    %1361 = vmatpush.msra.mxu0 %v372
    %1362 = vmatpush.msra.mxu0 %v368
    %1363 = vmatpush.msra.mxu0 %v364
    %1364 = vmatpush.msra.mxu0 %v360
    %1365 = vmatpush.msra.mxu0 %v356
    %1366 = vmatpush.msra.mxu0 %v352
    %1367 = vmatpush.msra.mxu0 %v348
    %1368 = vmatpush.msra.mxu0 %v344
    %1369 = vmatpush.msra.mxu0 %v340
    %1370 = vmatmul.f32.gmra.mxu0 %v1326
    %v1371 = vpop.f32.mrf.mxu0
    %v1372 = vadd.f32 0.0, %v1371
    %1373 = vdwg.mxu0
    %1374 = vmatpush.msra.mxu0 %v401
    %1375 = vmatpush.msra.mxu0 %v397
    %1376 = vmatpush.msra.mxu0 %v393
    %1377 = vmatpush.msra.mxu0 %v389
    %1378 = vmatpush.msra.mxu0 %v385
    %1379 = vmatpush.msra.mxu0 %v381
    %1380 = vmatpush.msra.mxu0 %v377
    %1381 = vmatpush.msra.mxu0 %v373
    %1382 = vmatpush.msra.mxu0 %v369
    %1383 = vmatpush.msra.mxu0 %v365
    %1384 = vmatpush.msra.mxu0 %v361
    %1385 = vmatpush.msra.mxu0 %v357
    %1386 = vmatpush.msra.mxu0 %v353
    %1387 = vmatpush.msra.mxu0 %v349
    %1388 = vmatpush.msra.mxu0 %v345
    %1389 = vmatpush.msra.mxu0 %v341
    %1390 = vmatmul.f32.gmra.mxu0 %v1326
    %v1391 = vpop.f32.mrf.mxu0
    %v1392 = vadd.f32 0.0, %v1391
    %1393 = vdwg.mxu0
    %1394 = vmatpush.msra.mxu0 %v402
    %1395 = vmatpush.msra.mxu0 %v398
    %1396 = vmatpush.msra.mxu0 %v394
    %1397 = vmatpush.msra.mxu0 %v390
    %1398 = vmatpush.msra.mxu0 %v386
    %1399 = vmatpush.msra.mxu0 %v382
    %1400 = vmatpush.msra.mxu0 %v378
    %1401 = vmatpush.msra.mxu0 %v374
    %1402 = vmatpush.msra.mxu0 %v370
    %1403 = vmatpush.msra.mxu0 %v366
    %1404 = vmatpush.msra.mxu0 %v362
    %1405 = vmatpush.msra.mxu0 %v358
    %1406 = vmatpush.msra.mxu0 %v354
    %1407 = vmatpush.msra.mxu0 %v350
    %1408 = vmatpush.msra.mxu0 %v346
    %1409 = vmatpush.msra.mxu0 %v342
    %1410 = vmatmul.f32.gmra.mxu0 %v1326
    %v1411 = vpop.f32.mrf.mxu0
    %v1412 = vadd.f32 0.0, %v1411
    %1413 = vdwg.mxu0
    %v1414 = vadd.f32 %v1330, %v1352
    %v1415 = vadd.f32 %v1331, %v1372
    %v1416 = vadd.f32 %v1332, %v1392
    %v1417 = vadd.f32 %v1333, %v1412
    %v1418 = vxor.u32 %v1414, 2147483648
    %v1419 = vmul.f32 %v1418, 1.442695
    %v1420 = vpow.pop %v1419
    %v1421 = vadd.f32 %v1420, 1.0
    %v1422 = vrcp.pop %v1421
    %v1423 = vmul.f32 %v1421, %v1422
    %v1424 = vsub.f32 1.0, %v1423
    %v1425 = vmul.f32 %v1422, %v1424
    %v1426 = vadd.f32 %v1422, %v1425
    %vm1427 = vweird.f32 %v1421
    %vm1428 = vweird.f32 %v1422
    %vm1429 = vmor %vm1427, %vm1428
    %v1430 = vsel %vm1429, %v1422, %v1426
    %v1431 = vand.u32 2147483647, %v1421
    %vm1432 = vcmp.eq.f32.partialorder %v1431, 8.507059e+37
    %v1433 = vand.u32 %v1421, 2147483648
    %v1434 = vor.u32 1.1754944e-38, %v1433
    %v1435 = vsel %vm1432, %v1434, %v1430
    %v1436 = vmul.f32 1.0, %v1435
    %v1437 = vxor.u32 %v1415, 2147483648
    %v1438 = vmul.f32 %v1437, 1.442695
    %v1439 = vpow.pop %v1438
    %v1440 = vadd.f32 %v1439, 1.0
    %v1441 = vrcp.pop %v1440
    %v1442 = vmul.f32 %v1440, %v1441
    %v1443 = vsub.f32 1.0, %v1442
    %v1444 = vmul.f32 %v1441, %v1443
    %v1445 = vadd.f32 %v1441, %v1444
    %vm1446 = vweird.f32 %v1440
    %vm1447 = vweird.f32 %v1441
    %vm1448 = vmor %vm1446, %vm1447
    %v1449 = vsel %vm1448, %v1441, %v1445
    %v1450 = vand.u32 2147483647, %v1440
    %vm1451 = vcmp.eq.f32.partialorder %v1450, 8.507059e+37
    %v1452 = vand.u32 %v1440, 2147483648
    %v1453 = vor.u32 1.1754944e-38, %v1452
    %v1454 = vsel %vm1451, %v1453, %v1449
    %v1455 = vmul.f32 1.0, %v1454
    %v1456 = vtanh.pop %v1416
    %v1457 = vxor.u32 %v1417, 2147483648
    %v1458 = vmul.f32 %v1457, 1.442695
    %v1459 = vpow.pop %v1458
    %v1460 = vadd.f32 %v1459, 1.0
    %v1461 = vrcp.pop %v1460
    %v1462 = vmul.f32 %v1460, %v1461
    %v1463 = vsub.f32 1.0, %v1462
    %v1464 = vmul.f32 %v1461, %v1463
    %v1465 = vadd.f32 %v1461, %v1464
    %vm1466 = vweird.f32 %v1460
    %vm1467 = vweird.f32 %v1461
    %vm1468 = vmor %vm1466, %vm1467
    %v1469 = vsel %vm1468, %v1461, %v1465
    %v1470 = vand.u32 2147483647, %v1460
    %vm1471 = vcmp.eq.f32.partialorder %v1470, 8.507059e+37
    %v1472 = vand.u32 %v1460, 2147483648
    %v1473 = vor.u32 1.1754944e-38, %v1472
    %v1474 = vsel %vm1471, %v1473, %v1469
    %v1475 = vmul.f32 1.0, %v1474
    %v1476 = vmul.f32 %v1455, %v1324
    %v1477 = vmul.f32 %v1436, %v1456
    %v1478 = vadd.f32 %v1476, %v1477
    %v1479 = vtanh.pop %v1478
    %v1480 = vmul.f32 %v1475, %v1479
    %s1481 = smul.u32 7, 4
    %s1482 = smul.addr %s1481, 8
    %s1483 = scalar_lea.vmem [#allocation2], %s1482
    %v1484 = vld [vmem:[%s1483] sm:$0xff]
    %v1485 = vld [vmem:[%s1483 + $0x8] sm:$0xff]
    %v1486 = vld [vmem:[%s1483 + $0x10] sm:$0xff]
    %v1487 = vld [vmem:[%s1483 + $0x18] sm:$0xff]
    %1488 = vmatpush.msra.mxu0 %v399
    %1489 = vmatpush.msra.mxu0 %v395
    %1490 = vmatpush.msra.mxu0 %v391
    %1491 = vmatpush.msra.mxu0 %v387
    %1492 = vmatpush.msra.mxu0 %v383
    %1493 = vmatpush.msra.mxu0 %v379
    %1494 = vmatpush.msra.mxu0 %v375
    %1495 = vmatpush.msra.mxu0 %v371
    %1496 = vmatpush.msra.mxu0 %v367
    %1497 = vmatpush.msra.mxu0 %v363
    %1498 = vmatpush.msra.mxu0 %v359
    %1499 = vmatpush.msra.mxu0 %v355
    %1500 = vmatpush.msra.mxu0 %v351
    %1501 = vmatpush.msra.mxu0 %v347
    %1502 = vmatpush.msra.mxu0 %v343
    %1503 = vmatpush.msra.mxu0 %v339
    %1504 = vmatmul.f32.gmra.mxu0 %v1480
    %v1505 = vpop.f32.mrf.mxu0
    %v1506 = vadd.f32 0.0, %v1505
    %1507 = vdwg.mxu0
    %1508 = vmatpush.msra.mxu0 %v400
    %1509 = vmatpush.msra.mxu0 %v396
    %1510 = vmatpush.msra.mxu0 %v392
    %1511 = vmatpush.msra.mxu0 %v388
    %1512 = vmatpush.msra.mxu0 %v384
    %1513 = vmatpush.msra.mxu0 %v380
    %1514 = vmatpush.msra.mxu0 %v376
    %1515 = vmatpush.msra.mxu0 %v372
    %1516 = vmatpush.msra.mxu0 %v368
    %1517 = vmatpush.msra.mxu0 %v364
    %1518 = vmatpush.msra.mxu0 %v360
    %1519 = vmatpush.msra.mxu0 %v356
    %1520 = vmatpush.msra.mxu0 %v352
    %1521 = vmatpush.msra.mxu0 %v348
    %1522 = vmatpush.msra.mxu0 %v344
    %1523 = vmatpush.msra.mxu0 %v340
    %1524 = vmatmul.f32.gmra.mxu0 %v1480
    %v1525 = vpop.f32.mrf.mxu0
    %v1526 = vadd.f32 0.0, %v1525
    %1527 = vdwg.mxu0
    %1528 = vmatpush.msra.mxu0 %v401
    %1529 = vmatpush.msra.mxu0 %v397
    %1530 = vmatpush.msra.mxu0 %v393
    %1531 = vmatpush.msra.mxu0 %v389
    %1532 = vmatpush.msra.mxu0 %v385
    %1533 = vmatpush.msra.mxu0 %v381
    %1534 = vmatpush.msra.mxu0 %v377
    %1535 = vmatpush.msra.mxu0 %v373
    %1536 = vmatpush.msra.mxu0 %v369
    %1537 = vmatpush.msra.mxu0 %v365
    %1538 = vmatpush.msra.mxu0 %v361
    %1539 = vmatpush.msra.mxu0 %v357
    %1540 = vmatpush.msra.mxu0 %v353
    %1541 = vmatpush.msra.mxu0 %v349
    %1542 = vmatpush.msra.mxu0 %v345
    %1543 = vmatpush.msra.mxu0 %v341
    %1544 = vmatmul.f32.gmra.mxu0 %v1480
    %v1545 = vpop.f32.mrf.mxu0
    %v1546 = vadd.f32 0.0, %v1545
    %1547 = vdwg.mxu0
    %1548 = vmatpush.msra.mxu0 %v402
    %1549 = vmatpush.msra.mxu0 %v398
    %1550 = vmatpush.msra.mxu0 %v394
    %1551 = vmatpush.msra.mxu0 %v390
    %1552 = vmatpush.msra.mxu0 %v386
    %1553 = vmatpush.msra.mxu0 %v382
    %1554 = vmatpush.msra.mxu0 %v378
    %1555 = vmatpush.msra.mxu0 %v374
    %1556 = vmatpush.msra.mxu0 %v370
    %1557 = vmatpush.msra.mxu0 %v366
    %1558 = vmatpush.msra.mxu0 %v362
    %1559 = vmatpush.msra.mxu0 %v358
    %1560 = vmatpush.msra.mxu0 %v354
    %1561 = vmatpush.msra.mxu0 %v350
    %1562 = vmatpush.msra.mxu0 %v346
    %1563 = vmatpush.msra.mxu0 %v342
    %1564 = vmatmul.f32.gmra.mxu0 %v1480
    %v1565 = vpop.f32.mrf.mxu0
    %v1566 = vadd.f32 0.0, %v1565
    %1567 = vdwg.mxu0
    %v1568 = vadd.f32 %v1484, %v1506
    %v1569 = vadd.f32 %v1485, %v1526
    %v1570 = vadd.f32 %v1486, %v1546
    %v1571 = vadd.f32 %v1487, %v1566
    %v1572 = vxor.u32 %v1568, 2147483648
    %v1573 = vmul.f32 %v1572, 1.442695
    %v1574 = vpow.pop %v1573
    %v1575 = vadd.f32 %v1574, 1.0
    %v1576 = vrcp.pop %v1575
    %v1577 = vmul.f32 %v1575, %v1576
    %v1578 = vsub.f32 1.0, %v1577
    %v1579 = vmul.f32 %v1576, %v1578
    %v1580 = vadd.f32 %v1576, %v1579
    %vm1581 = vweird.f32 %v1575
    %vm1582 = vweird.f32 %v1576
    %vm1583 = vmor %vm1581, %vm1582
    %v1584 = vsel %vm1583, %v1576, %v1580
    %v1585 = vand.u32 2147483647, %v1575
    %vm1586 = vcmp.eq.f32.partialorder %v1585, 8.507059e+37
    %v1587 = vand.u32 %v1575, 2147483648
    %v1588 = vor.u32 1.1754944e-38, %v1587
    %v1589 = vsel %vm1586, %v1588, %v1584
    %v1590 = vmul.f32 1.0, %v1589
    %v1591 = vxor.u32 %v1569, 2147483648
    %v1592 = vmul.f32 %v1591, 1.442695
    %v1593 = vpow.pop %v1592
    %v1594 = vadd.f32 %v1593, 1.0
    %v1595 = vrcp.pop %v1594
    %v1596 = vmul.f32 %v1594, %v1595
    %v1597 = vsub.f32 1.0, %v1596
    %v1598 = vmul.f32 %v1595, %v1597
    %v1599 = vadd.f32 %v1595, %v1598
    %vm1600 = vweird.f32 %v1594
    %vm1601 = vweird.f32 %v1595
    %vm1602 = vmor %vm1600, %vm1601
    %v1603 = vsel %vm1602, %v1595, %v1599
    %v1604 = vand.u32 2147483647, %v1594
    %vm1605 = vcmp.eq.f32.partialorder %v1604, 8.507059e+37
    %v1606 = vand.u32 %v1594, 2147483648
    %v1607 = vor.u32 1.1754944e-38, %v1606
    %v1608 = vsel %vm1605, %v1607, %v1603
    %v1609 = vmul.f32 1.0, %v1608
    %v1610 = vtanh.pop %v1570
    %v1611 = vxor.u32 %v1571, 2147483648
    %v1612 = vmul.f32 %v1611, 1.442695
    %v1613 = vpow.pop %v1612
    %v1614 = vadd.f32 %v1613, 1.0
    %v1615 = vrcp.pop %v1614
    %v1616 = vmul.f32 %v1614, %v1615
    %v1617 = vsub.f32 1.0, %v1616
    %v1618 = vmul.f32 %v1615, %v1617
    %v1619 = vadd.f32 %v1615, %v1618
    %vm1620 = vweird.f32 %v1614
    %vm1621 = vweird.f32 %v1615
    %vm1622 = vmor %vm1620, %vm1621
    %v1623 = vsel %vm1622, %v1615, %v1619
    %v1624 = vand.u32 2147483647, %v1614
    %vm1625 = vcmp.eq.f32.partialorder %v1624, 8.507059e+37
    %v1626 = vand.u32 %v1614, 2147483648
    %v1627 = vor.u32 1.1754944e-38, %v1626
    %v1628 = vsel %vm1625, %v1627, %v1623
    %v1629 = vmul.f32 1.0, %v1628
    %v1630 = vmul.f32 %v1609, %v1478
    %v1631 = vmul.f32 %v1590, %v1610
    %v1632 = vadd.f32 %v1630, %v1631
    %v1633 = vtanh.pop %v1632
    %v1634 = vmul.f32 %v1629, %v1633
    %v1635 = vld [vmem:[#allocation8] sm:$0xff]
    %v1636 = vld [vmem:[#allocation8 + $0x8] sm:$0xff]
    %v1637 = vld [vmem:[#allocation8 + $0x10] sm:$0xff]
    %v1638 = vld [vmem:[#allocation8 + $0x18] sm:$0xff]
    %v1639 = vld [vmem:[#allocation8 + $0x20] sm:$0xff]
    %v1640 = vld [vmem:[#allocation8 + $0x28] sm:$0xff]
    %v1641 = vld [vmem:[#allocation8 + $0x30] sm:$0xff]
    %v1642 = vld [vmem:[#allocation8 + $0x38] sm:$0xff]
    %v1643 = vld [vmem:[#allocation8 + $0x40] sm:$0xff]
    %v1644 = vld [vmem:[#allocation8 + $0x48] sm:$0xff]
    %v1645 = vld [vmem:[#allocation8 + $0x50] sm:$0xff]
    %v1646 = vld [vmem:[#allocation8 + $0x58] sm:$0xff]
    %v1647 = vld [vmem:[#allocation8 + $0x60] sm:$0xff]
    %v1648 = vld [vmem:[#allocation8 + $0x68] sm:$0xff]
    %v1649 = vld [vmem:[#allocation8 + $0x70] sm:$0xff]
    %v1650 = vld [vmem:[#allocation8 + $0x78] sm:$0xff]
    %v1651 = vld [vmem:[%s5] sm:$0x1]
    %v1653 = vperm.slane %v1651, 0
    %1655 = vmatpush.msra.mxu0 %v1650
    %1656 = vmatpush.msra.mxu0 %v1649
    %1657 = vmatpush.msra.mxu0 %v1648
    %1658 = vmatpush.msra.mxu0 %v1647
    %1659 = vmatpush.msra.mxu0 %v1646
    %1660 = vmatpush.msra.mxu0 %v1645
    %1661 = vmatpush.msra.mxu0 %v1644
    %1662 = vmatpush.msra.mxu0 %v1643
    %1663 = vmatpush.msra.mxu0 %v1642
    %1664 = vmatpush.msra.mxu0 %v1641
    %1665 = vmatpush.msra.mxu0 %v1640
    %1666 = vmatpush.msra.mxu0 %v1639
    %1667 = vmatpush.msra.mxu0 %v1638
    %1668 = vmatpush.msra.mxu0 %v1637
    %1669 = vmatpush.msra.mxu0 %v1636
    %1670 = vmatpush.msra.mxu0 %v1635
    %1671 = vmatmul.f32.gmra.mxu0 %v1634
    %v1672 = vpop.f32.mrf.mxu0
    %v1673 = vadd.f32 %v1653, %v1672
    %1674 = vdwg.mxu0
    %1675 = vst [vmem:[#allocation9] sm:$0xff] %v1673
    // Predicated region
    $region38: #{tpu_custom_call.1} parent=1 // pred_check
      _
    $region39: #{tpu_custom_call.1} parent=1 // pred_check_branch
      %1677 = sbr.rel (0) target = $region41
    $region40: #{tpu_custom_call.1} parent=1 // pred_region
      %1679 = vsyncadd [#allocation5], 0
      %s1681 = sshll.u32 [#allocation9], 4
      %s1682 = int_to_ptr.vmem [resolvable:$true] %s1681
      %s1683 = sshll.u32 %s6, 4
      %s1684 = int_to_ptr.hbm [resolvable:$true] %s1683
      %1686 = dma.vmem_to_hbm [thread:$0]  %s1682, 128, %s1684, [#allocation5]
    $region41: #{tpu_custom_call.1} parent=1 // pred_fallthru
      _
    // Predicated region
    $region42: #{tpu_custom_call.1} parent=1 // pred_check
      _
    $region43: #{tpu_custom_call.1} parent=1 // pred_check_branch
      %1688 = sbr.rel (0) target = $region45
    $region44: #{tpu_custom_call.1} parent=1 // pred_region
      %1690 = dma.done [#allocation5], 128
    $region45: #{tpu_custom_call.1} parent=1 // pred_fallthru
      _
    %1691 = vsyncpa [#allocation4], 1
    %1692 = vsyncpa [#allocation7], 1
    %1693 = vsyncpa [#allocation5], 1

</llo_original>
